<compile_context>
chip_gen: v6e
topology: v6e:2x2x1
jax: 0.10.0
libtpu: 0.0.40
codegen_flags: <defaults>
</compile_context>

<pallas_src>
import numpy as np
import jax
import jax.numpy as jnp
from jax import lax
from jax.experimental import pallas as pl
from jax.experimental.pallas import tpu as pltpu


# ----------------------------------------------------------------------------
# Fused ConvGRU kernel: one (batch, row-strip) tile per grid step.
# ----------------------------------------------------------------------------
def conv_gru_kernel(x_ref, top_ref, bot_ref, w_ref, b_ref, o_ref,
                    xpad_ref, col_ref):
    # x_ref   : (1, TH, W, C)  bf16  row strip of the NHWC input
    # top_ref : (1, 1, W, C)   bf16  row just above the strip (clamped; masked at j==0)
    # bot_ref : (1, 1, W, C)   bf16  row just below the strip (clamped; masked at j==last)
    # w_ref   : (2C, 9C)       bf16  [z-gate ; candidate] weights (tap-major, ci minor)
    # b_ref   : (2C, 1)        f32   [b_z ; b_c]
    # o_ref   : (1, C, TH*W)   bf16  h tile, pixels on the lane axis (NCHW-flat)
    # xpad_ref: (TH+2, W+2, C) bf16  VMEM scratch: zero-padded strip
    # col_ref : (TH, W, 9C)    bf16  VMEM scratch: im2col patches
    _, TH, W, C = x_ref.shape
    dt = xpad_ref.dtype
    j = pl.program_id(1)
    nstrips = pl.num_programs(1)

    # ---- 1) Assemble the zero-padded strip in VMEM (no wrapper-side jnp.pad). ----
    xpad_ref[:, 0:1, :] = jnp.zeros((TH + 2, 1, C), dt)            # left pad col
    xpad_ref[:, W + 1:W + 2, :] = jnp.zeros((TH + 2, 1, C), dt)    # right pad col
    zrow = jnp.zeros((1, W, C), dt)
    xpad_ref[0:1, 1:W + 1, :] = jnp.where(j > 0, top_ref[0], zrow)
    xpad_ref[TH + 1:TH + 2, 1:W + 1, :] = jnp.where(j < nstrips - 1, bot_ref[0], zrow)
    xpad_ref[1:TH + 1, 1:W + 1, :] = x_ref[0]

    # ---- 2) im2col: 9 shifted (TH, W, C) views -> one (TH, W, 9C) patch tensor. ----
    for dy in range(3):
        for dx in range(3):
            t = dy * 3 + dx
            col_ref[:, :, t * C:(t + 1) * C] = xpad_ref[dy:dy + TH, dx:dx + W, :]

    # ---- 3) One MXU matmul for BOTH gates (K = 9C), pixels land on lanes. ----
    col = col_ref[...].reshape(TH * W, 9 * C)          # last-dim-preserving reshape
    acc = lax.dot_general(                              # (2C, 9C) x (TH*W, 9C)^T
        w_ref[...], col,
        dimension_numbers=(((1,), (1,)), ((), ())),
        preferred_element_type=jnp.float32)             # -> (2C, TH*W) f32
    acc = acc + b_ref[...]

    # ---- 4) Lane-dense epilogue + store:  h = sigmoid(z) * tanh(c). ----
    z = jax.nn.sigmoid(acc[:C, :])
    c = jnp.tanh(acc[C:, :])
    o_ref[0] = (z * c).astype(o_ref.dtype)              # (C, TH*W) NCHW-flat tile


# ----------------------------------------------------------------------------
# Wrapper.
# ----------------------------------------------------------------------------
def _choose_row_block(H, W, C, row_block):
    if row_block is None:
        bytes_per_row = W * C * 2                       # bf16
        budget_rows = max(8, (4 << 20) // max(1, 16 * bytes_per_row))
        row_block = H
        for cand in range(min(H, budget_rows), 0, -1):
            if H % cand == 0 and ((cand * W) % 128 == 0 or cand == H):
                row_block = cand
                break
    row_block = int(row_block)
    assert H % row_block == 0, "row_block must divide H"
    assert (row_block * W) % 128 == 0 or row_block == H, (
        "row_block * W must be a multiple of 128 (or row_block == H) so the "
        "output tile stays lane-dense / BlockSpec-conformant")
    return row_block


def conv_gru_forward(x_nhwc, w_mat, b_vec, *, row_block=None,
                     vmem_limit_bytes=32 * 1024 * 1024):
    """ConvGRU forward. x_nhwc: (N, H, W, C) -> h as NCHW (N, C, H, W), bf16."""
    N, H, W, C = x_nhwc.shape
    C2 = 2 * C
    assert w_mat.shape == (C2, 9 * C) and b_vec.shape == (C2,)
    TH = _choose_row_block(H, W, C, row_block)
    nstrips = H // TH

    x = x_nhwc.astype(jnp.bfloat16)
    w = w_mat.astype(jnp.bfloat16)
    b = b_vec.astype(jnp.float32).reshape(C2, 1)

    out_flat = pl.pallas_call(
        conv_gru_kernel,
        out_shape=jax.ShapeDtypeStruct((N, C, H * W), jnp.bfloat16),
        grid=(N, nstrips),
        in_specs=[
            # row strip
            pl.BlockSpec((1, TH, W, C), lambda n, j: (n, j, 0, 0)),
            # 1-row halos (clamped at the image border; masked inside the kernel)
            pl.BlockSpec((1, 1, W, C),
                         lambda n, j: (n, jnp.maximum(j * TH - 1, 0), 0, 0)),
            pl.BlockSpec((1, 1, W, C),
                         lambda n, j: (n, jnp.minimum((j + 1) * TH, H - 1), 0, 0)),
            # resident weights / bias (constant index maps -> no re-DMA)
            pl.BlockSpec((C2, 9 * C), lambda n, j: (0, 0)),
            pl.BlockSpec((C2, 1), lambda n, j: (0, 0)),
        ],
        out_specs=pl.BlockSpec((1, C, TH * W), lambda n, j: (n, 0, j)),
        scratch_shapes=[
            pltpu.VMEM((TH + 2, W + 2, C), jnp.bfloat16),   # padded strip
            pltpu.VMEM((TH, W, 9 * C), jnp.bfloat16),       # im2col patches
        ],
        compiler_params=pltpu.CompilerParams(
            dimension_semantics=("parallel", "parallel"),    # megacore-shardable (v7x)
            vmem_limit_bytes=vmem_limit_bytes),
    )(x, x, x, w, b)

    # (N, C, H*W) -> (N, C, H, W): contiguous reshape, no transpose / extra HBM pass.
    return out_flat.reshape(N, C, H, W)


def conv_gru_forward_nchw(x_nchw, w_mat, b_vec, **kw):
    """Drop-in for the PyTorch NCHW interface (one input transpose; the output is
    already NCHW so no output transpose is needed)."""
    return conv_gru_forward(jnp.transpose(x_nchw, (0, 2, 3, 1)), w_mat, b_vec, **kw)


# ----------------------------------------------------------------------------
# Weight packing (PyTorch ConvGRU params -> fused kernel params).
# ----------------------------------------------------------------------------
def pack_gru_weights(w_ih, b_ih, w_hh, b_hh):
    """w_ih (2C,2C,3,3), b_ih (2C,), w_hh (C,2C,3,3), b_hh (C,)  ->  (2C,9C), (2C,).

    With h == 0 only the x-half of the input channels contributes, and only the
    z-gate rows of conv_ih are used (r is discarded by the module)."""
    C2 = w_ih.shape[0]
    C = C2 // 2
    wz = w_ih[C:, :C]                          # (C, C, 3, 3)  z-gate, x-input half
    wc = w_hh[:, :C]                           # (C, C, 3, 3)  candidate, x-input half
    w = jnp.concatenate([wz, wc], axis=0)      # (2C, C, 3, 3) OIHW
    # -> (2C, 3, 3, C) -> (2C, 9C): column index = (dy*3 + dx)*C + ci
    w_mat = jnp.transpose(w, (0, 2, 3, 1)).reshape(C2, 9 * C)
    b = jnp.concatenate([b_ih[C:], b_hh], axis=0)
    return w_mat, b


# ----------------------------------------------------------------------------
# Pure-JAX reference (direct transcription of the PyTorch forward, NHWC).
# ----------------------------------------------------------------------------
def conv_gru_reference(x_nhwc, w_ih, b_ih, w_hh, b_hh):
    C = w_hh.shape[0]
    xh = jnp.concatenate([x_nhwc, jnp.zeros_like(x_nhwc)], axis=-1)

    def conv(inp, w_oihw, bias):
        w_hwio = jnp.transpose(w_oihw, (2, 3, 1, 0))
        y = lax.conv_general_dilated(
            inp, w_hwio, window_strides=(1, 1), padding="SAME",
            dimension_numbers=("NHWC", "HWIO", "NHWC"),
            preferred_element_type=jnp.float32)
        return y + bias.astype(jnp.float32)

    rz = jax.nn.sigmoid(conv(xh, w_ih, b_ih))
    z = rz[..., C:]                            # split(C) -> (r, z); r unused
    c = jnp.tanh(conv(xh, w_hh, b_hh))
    return z * c                               # (N, H, W, C) f32


if __name__ == "__main__":
    key = jax.random.PRNGKey(0)
    kx, k1, k2, k3, k4 = jax.random.split(key, 5)

    N, C, H, W = 2, 8, 16, 16                  # ConvGRU(channels=8) on 16x16 frames
    # NHWC input: keeping the surrounding graph channels-last removes the boundary
    # transposes (the PyTorch module is NCHW; conv_gru_forward_nchw is the drop-in).
    x = jax.random.normal(kx, (N, H, W, C), jnp.float32)
    w_ih = jax.random.normal(k1, (2 * C, 2 * C, 3, 3), jnp.float32) * 0.1
    b_ih = jax.random.normal(k2, (2 * C,), jnp.float32) * 0.1
    w_hh = jax.random.normal(k3, (C, 2 * C, 3, 3), jnp.float32) * 0.1
    b_hh = jax.random.normal(k4, (C,), jnp.float32) * 0.1

    w_mat, b_vec = pack_gru_weights(w_ih, b_ih, w_hh, b_hh)

    # row_block=8 -> 2 row strips per image: exercises the in-kernel halo path.
    out = conv_gru_forward(x, w_mat, b_vec, row_block=8)
    out = jax.block_until_ready(out)
    assert out.shape == (N, C, H, W), out.shape
    assert bool(jnp.all(jnp.isfinite(out.astype(jnp.float32))))

    # Reference with the same bf16 quantization of activations/weights, f32 math.
    ref = conv_gru_reference(x.astype(jnp.bfloat16),
                             w_ih.astype(jnp.bfloat16), b_ih,
                             w_hh.astype(jnp.bfloat16), b_hh)
    ref_nchw = jnp.transpose(ref, (0, 3, 1, 2))
    np.testing.assert_allclose(np.asarray(out.astype(jnp.float32)),
                               np.asarray(ref_nchw.astype(jnp.float32)),
                               rtol=2e-2, atol=2e-2)
    print("KERNEL_OK")
</pallas_src>

<mosaic_0001>
module attributes {stable_mosaic.version = 11 : i64} {
  func.func @conv_gru_kernel(%arg0: i32, %arg1: i32, %arg2: memref<1x8x16x8xbf16, #tpu.memory_space<vmem>>, %arg3: memref<1x1x16x8xbf16, #tpu.memory_space<vmem>>, %arg4: memref<1x1x16x8xbf16, #tpu.memory_space<vmem>>, %arg5: memref<16x72xbf16, #tpu.memory_space<vmem>>, %arg6: memref<16x1xf32, #tpu.memory_space<vmem>>, %arg7: memref<1x8x128xbf16, #tpu.memory_space<vmem>>, %arg8: memref<10x18x8xbf16, #tpu.memory_space<vmem>>, %arg9: memref<8x16x72xbf16, #tpu.memory_space<vmem>>) attributes {dimension_semantics = [#tpu.dimension_semantics<parallel>, #tpu.dimension_semantics<parallel>], iteration_bounds = array<i64: 2, 2>, scalar_prefetch = 0 : i64, scratch_operands = 2 : i64, tpu.core_type = #tpu.core_type<tc>, window_params = [{transform_indices = @transform_0, window_bounds = array<i64: 1, 8, 16, 8>}, {transform_indices = @transform_1, window_bounds = array<i64: 1, 1, 16, 8>}, {transform_indices = @transform_2, window_bounds = array<i64: 1, 1, 16, 8>}, {pipeline_mode = #tpu.pipeline_mode<synchronous>, transform_indices = @transform_3, window_bounds = array<i64: 16, 72>}, {pipeline_mode = #tpu.pipeline_mode<synchronous>, transform_indices = @transform_4, window_bounds = array<i64: 16, 1>}, {transform_indices = @transform_5, window_bounds = array<i64: 1, 8, 128>}]} {
    %cst = arith.constant 0.000000e+00 : bf16
    %0 = vector.broadcast %cst : bf16 to vector<10x1x8xbf16>
    %c0 = arith.constant 0 : index
    %c0_0 = arith.constant 0 : index
    %c0_1 = arith.constant 0 : index
    %1 = vector.load %arg8[%c0, %c0_0, %c0_1] : memref<10x18x8xbf16, #tpu.memory_space<vmem>>, vector<10x1x8xbf16>
    tpu.vector_store %arg8[%c0, %c0_0, %c0_1], %0 {strides = array<i32>} : memref<10x18x8xbf16, #tpu.memory_space<vmem>>, vector<10x1x8xbf16>,
    %cst_2 = arith.constant 0.000000e+00 : bf16
    %2 = vector.broadcast %cst_2 : bf16 to vector<10x1x8xbf16>
    %c0_3 = arith.constant 0 : index
    %c17 = arith.constant 17 : index
    %c0_4 = arith.constant 0 : index
    %3 = vector.load %arg8[%c0_3, %c17, %c0_4] : memref<10x18x8xbf16, #tpu.memory_space<vmem>>, vector<10x1x8xbf16>
    tpu.vector_store %arg8[%c0_3, %c17, %c0_4], %2 {strides = array<i32>} : memref<10x18x8xbf16, #tpu.memory_space<vmem>>, vector<10x1x8xbf16>,
    %cst_5 = arith.constant 0.000000e+00 : bf16
    %4 = vector.broadcast %cst_5 : bf16 to vector<1x16x8xbf16>
    %c0_i32 = arith.constant 0 : i32
    %5 = arith.cmpi sgt, %arg1, %c0_i32 : i32
    %c0_6 = arith.constant 0 : index
    %c0_7 = arith.constant 0 : index
    %c0_8 = arith.constant 0 : index
    %c0_9 = arith.constant 0 : index
    %6 = vector.load %arg3[%c0_6, %c0_7, %c0_8, %c0_9] : memref<1x1x16x8xbf16, #tpu.memory_space<vmem>>, vector<1x1x16x8xbf16>
    %7 = vector.shape_cast %6 : vector<1x1x16x8xbf16> to vector<1x16x8xbf16>
    %8 = arith.select %5, %7, %4 : vector<1x16x8xbf16>
    %c0_10 = arith.constant 0 : index
    %c1 = arith.constant 1 : index
    %c0_11 = arith.constant 0 : index
    %9 = vector.load %arg8[%c0_10, %c1, %c0_11] : memref<10x18x8xbf16, #tpu.memory_space<vmem>>, vector<1x16x8xbf16>
    tpu.vector_store %arg8[%c0_10, %c1, %c0_11], %8 {strides = array<i32>} : memref<10x18x8xbf16, #tpu.memory_space<vmem>>, vector<1x16x8xbf16>,
    %c1_i32 = arith.constant 1 : i32
    %10 = arith.cmpi slt, %arg1, %c1_i32 : i32
    %c0_12 = arith.constant 0 : index
    %c0_13 = arith.constant 0 : index
    %c0_14 = arith.constant 0 : index
    %c0_15 = arith.constant 0 : index
    %11 = vector.load %arg4[%c0_12, %c0_13, %c0_14, %c0_15] : memref<1x1x16x8xbf16, #tpu.memory_space<vmem>>, vector<1x1x16x8xbf16>
    %12 = vector.shape_cast %11 : vector<1x1x16x8xbf16> to vector<1x16x8xbf16>
    %13 = arith.select %10, %12, %4 : vector<1x16x8xbf16>
    %c9 = arith.constant 9 : index
    %c1_16 = arith.constant 1 : index
    %c0_17 = arith.constant 0 : index
    %14 = vector.load %arg8[%c9, %c1_16, %c0_17] : memref<10x18x8xbf16, #tpu.memory_space<vmem>>, vector<1x16x8xbf16>
    tpu.vector_store %arg8[%c9, %c1_16, %c0_17], %13 {strides = array<i32>} : memref<10x18x8xbf16, #tpu.memory_space<vmem>>, vector<1x16x8xbf16>,
    %c0_18 = arith.constant 0 : index
    %c0_19 = arith.constant 0 : index
    %c0_20 = arith.constant 0 : index
    %c0_21 = arith.constant 0 : index
    %15 = vector.load %arg2[%c0_18, %c0_19, %c0_20, %c0_21] : memref<1x8x16x8xbf16, #tpu.memory_space<vmem>>, vector<1x8x16x8xbf16>
    %16 = vector.shape_cast %15 : vector<1x8x16x8xbf16> to vector<8x16x8xbf16>
    %c1_22 = arith.constant 1 : index
    %c1_23 = arith.constant 1 : index
    %c0_24 = arith.constant 0 : index
    %17 = vector.load %arg8[%c1_22, %c1_23, %c0_24] : memref<10x18x8xbf16, #tpu.memory_space<vmem>>, vector<8x16x8xbf16>
    tpu.vector_store %arg8[%c1_22, %c1_23, %c0_24], %16 {strides = array<i32>} : memref<10x18x8xbf16, #tpu.memory_space<vmem>>, vector<8x16x8xbf16>,
    %c0_25 = arith.constant 0 : index
    %c0_26 = arith.constant 0 : index
    %c0_27 = arith.constant 0 : index
    %18 = vector.load %arg8[%c0_25, %c0_26, %c0_27] : memref<10x18x8xbf16, #tpu.memory_space<vmem>>, vector<8x16x8xbf16>
    %c0_28 = arith.constant 0 : index
    %c0_29 = arith.constant 0 : index
    %c0_30 = arith.constant 0 : index
    %19 = vector.load %arg9[%c0_28, %c0_29, %c0_30] : memref<8x16x72xbf16, #tpu.memory_space<vmem>>, vector<8x16x8xbf16>
    tpu.vector_store %arg9[%c0_28, %c0_29, %c0_30], %18 {strides = array<i32>} : memref<8x16x72xbf16, #tpu.memory_space<vmem>>, vector<8x16x8xbf16>,
    %c0_31 = arith.constant 0 : index
    %c1_32 = arith.constant 1 : index
    %c0_33 = arith.constant 0 : index
    %20 = vector.load %arg8[%c0_31, %c1_32, %c0_33] : memref<10x18x8xbf16, #tpu.memory_space<vmem>>, vector<8x16x8xbf16>
    %c0_34 = arith.constant 0 : index
    %c0_35 = arith.constant 0 : index
    %c8 = arith.constant 8 : index
    %21 = vector.load %arg9[%c0_34, %c0_35, %c8] : memref<8x16x72xbf16, #tpu.memory_space<vmem>>, vector<8x16x8xbf16>
    tpu.vector_store %arg9[%c0_34, %c0_35, %c8], %20 {strides = array<i32>} : memref<8x16x72xbf16, #tpu.memory_space<vmem>>, vector<8x16x8xbf16>,
    %c0_36 = arith.constant 0 : index
    %c2 = arith.constant 2 : index
    %c0_37 = arith.constant 0 : index
    %22 = vector.load %arg8[%c0_36, %c2, %c0_37] : memref<10x18x8xbf16, #tpu.memory_space<vmem>>, vector<8x16x8xbf16>
    %c0_38 = arith.constant 0 : index
    %c0_39 = arith.constant 0 : index
    %c16 = arith.constant 16 : index
    %23 = vector.load %arg9[%c0_38, %c0_39, %c16] : memref<8x16x72xbf16, #tpu.memory_space<vmem>>, vector<8x16x8xbf16>
    tpu.vector_store %arg9[%c0_38, %c0_39, %c16], %22 {strides = array<i32>} : memref<8x16x72xbf16, #tpu.memory_space<vmem>>, vector<8x16x8xbf16>,
    %c1_40 = arith.constant 1 : index
    %c0_41 = arith.constant 0 : index
    %c0_42 = arith.constant 0 : index
    %24 = vector.load %arg8[%c1_40, %c0_41, %c0_42] : memref<10x18x8xbf16, #tpu.memory_space<vmem>>, vector<8x16x8xbf16>
    %c0_43 = arith.constant 0 : index
    %c0_44 = arith.constant 0 : index
    %c24 = arith.constant 24 : index
    %25 = vector.load %arg9[%c0_43, %c0_44, %c24] : memref<8x16x72xbf16, #tpu.memory_space<vmem>>, vector<8x16x8xbf16>
    tpu.vector_store %arg9[%c0_43, %c0_44, %c24], %24 {strides = array<i32>} : memref<8x16x72xbf16, #tpu.memory_space<vmem>>, vector<8x16x8xbf16>,
    %c1_45 = arith.constant 1 : index
    %c1_46 = arith.constant 1 : index
    %c0_47 = arith.constant 0 : index
    %26 = vector.load %arg8[%c1_45, %c1_46, %c0_47] : memref<10x18x8xbf16, #tpu.memory_space<vmem>>, vector<8x16x8xbf16>
    %c0_48 = arith.constant 0 : index
    %c0_49 = arith.constant 0 : index
    %c32 = arith.constant 32 : index
    %27 = vector.load %arg9[%c0_48, %c0_49, %c32] : memref<8x16x72xbf16, #tpu.memory_space<vmem>>, vector<8x16x8xbf16>
    tpu.vector_store %arg9[%c0_48, %c0_49, %c32], %26 {strides = array<i32>} : memref<8x16x72xbf16, #tpu.memory_space<vmem>>, vector<8x16x8xbf16>,
    %c1_50 = arith.constant 1 : index
    %c2_51 = arith.constant 2 : index
    %c0_52 = arith.constant 0 : index
    %28 = vector.load %arg8[%c1_50, %c2_51, %c0_52] : memref<10x18x8xbf16, #tpu.memory_space<vmem>>, vector<8x16x8xbf16>
    %c0_53 = arith.constant 0 : index
    %c0_54 = arith.constant 0 : index
    %c40 = arith.constant 40 : index
    %29 = vector.load %arg9[%c0_53, %c0_54, %c40] : memref<8x16x72xbf16, #tpu.memory_space<vmem>>, vector<8x16x8xbf16>
    tpu.vector_store %arg9[%c0_53, %c0_54, %c40], %28 {strides = array<i32>} : memref<8x16x72xbf16, #tpu.memory_space<vmem>>, vector<8x16x8xbf16>,
    %c2_55 = arith.constant 2 : index
    %c0_56 = arith.constant 0 : index
    %c0_57 = arith.constant 0 : index
    %30 = vector.load %arg8[%c2_55, %c0_56, %c0_57] : memref<10x18x8xbf16, #tpu.memory_space<vmem>>, vector<8x16x8xbf16>
    %c0_58 = arith.constant 0 : index
    %c0_59 = arith.constant 0 : index
    %c48 = arith.constant 48 : index
    %31 = vector.load %arg9[%c0_58, %c0_59, %c48] : memref<8x16x72xbf16, #tpu.memory_space<vmem>>, vector<8x16x8xbf16>
    tpu.vector_store %arg9[%c0_58, %c0_59, %c48], %30 {strides = array<i32>} : memref<8x16x72xbf16, #tpu.memory_space<vmem>>, vector<8x16x8xbf16>,
    %c2_60 = arith.constant 2 : index
    %c1_61 = arith.constant 1 : index
    %c0_62 = arith.constant 0 : index
    %32 = vector.load %arg8[%c2_60, %c1_61, %c0_62] : memref<10x18x8xbf16, #tpu.memory_space<vmem>>, vector<8x16x8xbf16>
    %c0_63 = arith.constant 0 : index
    %c0_64 = arith.constant 0 : index
    %c56 = arith.constant 56 : index
    %33 = vector.load %arg9[%c0_63, %c0_64, %c56] : memref<8x16x72xbf16, #tpu.memory_space<vmem>>, vector<8x16x8xbf16>
    tpu.vector_store %arg9[%c0_63, %c0_64, %c56], %32 {strides = array<i32>} : memref<8x16x72xbf16, #tpu.memory_space<vmem>>, vector<8x16x8xbf16>,
    %c2_65 = arith.constant 2 : index
    %c2_66 = arith.constant 2 : index
    %c0_67 = arith.constant 0 : index
    %34 = vector.load %arg8[%c2_65, %c2_66, %c0_67] : memref<10x18x8xbf16, #tpu.memory_space<vmem>>, vector<8x16x8xbf16>
    %c0_68 = arith.constant 0 : index
    %c0_69 = arith.constant 0 : index
    %c64 = arith.constant 64 : index
    %35 = vector.load %arg9[%c0_68, %c0_69, %c64] : memref<8x16x72xbf16, #tpu.memory_space<vmem>>, vector<8x16x8xbf16>
    tpu.vector_store %arg9[%c0_68, %c0_69, %c64], %34 {strides = array<i32>} : memref<8x16x72xbf16, #tpu.memory_space<vmem>>, vector<8x16x8xbf16>,
    %c0_70 = arith.constant 0 : index
    %c0_71 = arith.constant 0 : index
    %c0_72 = arith.constant 0 : index
    %36 = vector.load %arg9[%c0_70, %c0_71, %c0_72] : memref<8x16x72xbf16, #tpu.memory_space<vmem>>, vector<8x16x72xbf16>
    %37 = vector.shape_cast %36 : vector<8x16x72xbf16> to vector<128x72xbf16>
    %c0_73 = arith.constant 0 : index
    %c0_74 = arith.constant 0 : index
    %38 = vector.load %arg5[%c0_73, %c0_74] : memref<16x72xbf16, #tpu.memory_space<vmem>>, vector<16x72xbf16>
    %cst_75 = arith.constant dense<0.000000e+00> : vector<16x128xf32>
    %39 = tpu.matmul %38, %37, %cst_75 {dimension_numbers = #tpu.dot_dimension_numbers<[1], [1], [0], [0], [0, 0, 1, 0], [], []>} : vector<16x72xbf16>, vector<128x72xbf16>, vector<16x128xf32> -> vector<16x128xf32>
    %c0_76 = arith.constant 0 : index
    %c0_77 = arith.constant 0 : index
    %40 = vector.load %arg6[%c0_76, %c0_77] : memref<16x1xf32, #tpu.memory_space<vmem>>, vector<16x1xf32>
    %41 = vector.broadcast %40 : vector<16x1xf32> to vector<16x128xf32>
    %42 = arith.addf %39, %41 : vector<16x128xf32>
    %43 = vector.extract_strided_slice %42 {offsets = [0, 0], sizes = [8, 128], strides = [1, 1]} : vector<16x128xf32> to vector<8x128xf32>
    %44 = arith.negf %43 : vector<8x128xf32>
    %45 = math.exp %44 : vector<8x128xf32>
    %cst_78 = arith.constant 1.000000e+00 : f32
    %46 = vector.broadcast %cst_78 : f32 to vector<8x128xf32>
    %47 = arith.addf %46, %45 : vector<8x128xf32>
    %48 = arith.divf %46, %47 : vector<8x128xf32>
    %49 = vector.extract_strided_slice %42 {offsets = [8, 0], sizes = [8, 128], strides = [1, 1]} : vector<16x128xf32> to vector<8x128xf32>
    %50 = math.tanh %49 : vector<8x128xf32>
    %51 = arith.mulf %48, %50 : vector<8x128xf32>
    %52 = arith.truncf %51 : vector<8x128xf32> to vector<8x128xbf16>
    %c0_79 = arith.constant 0 : index
    %c0_80 = arith.constant 0 : index
    %c0_81 = arith.constant 0 : index
    %53 = vector.load %arg7[%c0_79, %c0_80, %c0_81] : memref<1x8x128xbf16, #tpu.memory_space<vmem>>, vector<1x8x128xbf16>
    %54 = vector.shape_cast %53 : vector<1x8x128xbf16> to vector<8x128xbf16>
    %55 = vector.shape_cast %52 : vector<8x128xbf16> to vector<1x8x128xbf16>
    tpu.vector_store %arg7[%c0_79, %c0_80, %c0_81], %55 {strides = array<i32>} : memref<1x8x128xbf16, #tpu.memory_space<vmem>>, vector<1x8x128xbf16>,
    return
  }
  func.func @transform_0(%arg0: i32, %arg1: i32) -> (i32, i32, i32, i32) {
    %c0_i32 = arith.constant 0 : i32
    %c0_i32_0 = arith.constant 0 : i32
    %c0_i32_1 = arith.constant 0 : i32
    return %arg0, %arg1, %c0_i32, %c0_i32_0 : i32, i32, i32, i32
  }
  func.func @transform_1(%arg0: i32, %arg1: i32) -> (i32, i32, i32, i32) {
    %c8_i32 = arith.constant 8 : i32
    %0 = arith.muli %arg1, %c8_i32 : i32
    %c1_i32 = arith.constant 1 : i32
    %1 = arith.subi %0, %c1_i32 : i32
    %c0_i32 = arith.constant 0 : i32
    %2 = arith.maxsi %1, %c0_i32 : i32
    %c0_i32_0 = arith.constant 0 : i32
    %c0_i32_1 = arith.constant 0 : i32
    %c0_i32_2 = arith.constant 0 : i32
    return %arg0, %2, %c0_i32_0, %c0_i32_1 : i32, i32, i32, i32
  }
  func.func @transform_2(%arg0: i32, %arg1: i32) -> (i32, i32, i32, i32) {
    %c1_i32 = arith.constant 1 : i32
    %0 = arith.addi %arg1, %c1_i32 : i32
    %c8_i32 = arith.constant 8 : i32
    %1 = arith.muli %0, %c8_i32 : i32
    %c15_i32 = arith.constant 15 : i32
    %2 = arith.minsi %1, %c15_i32 : i32
    %c0_i32 = arith.constant 0 : i32
    %c0_i32_0 = arith.constant 0 : i32
    %c0_i32_1 = arith.constant 0 : i32
    return %arg0, %2, %c0_i32, %c0_i32_0 : i32, i32, i32, i32
  }
  func.func @transform_3(%arg0: i32, %arg1: i32) -> (i32, i32) {
    %c0_i32 = arith.constant 0 : i32
    %c0_i32_0 = arith.constant 0 : i32
    %c0_i32_1 = arith.constant 0 : i32
    return %c0_i32, %c0_i32_0 : i32, i32
  }
  func.func @transform_4(%arg0: i32, %arg1: i32) -> (i32, i32) {
    %c0_i32 = arith.constant 0 : i32
    %c0_i32_0 = arith.constant 0 : i32
    %c0_i32_1 = arith.constant 0 : i32
    return %c0_i32, %c0_i32_0 : i32, i32
  }
  func.func @transform_5(%arg0: i32, %arg1: i32) -> (i32, i32, i32) {
    %c0_i32 = arith.constant 0 : i32
    %c0_i32_0 = arith.constant 0 : i32
    return %arg0, %c0_i32, %arg1 : i32, i32, i32
  }
}

</mosaic_0001>

<llo_original>
// kernel: tpu_custom_call.1
$region0: #{tpu_custom_call.1}
  #allocation0 [shape = 'u32[]', space=smem, size = 0x4, offset = 0x4, fixed_abs, tag = 'smem constant byte address 0x4 - core index']
  #allocation1 [shape = 'u32[144,128]{1,0:T(1,128)}', space=vmem, size = 0x12000, scoped, tag = 'internal scratch']
  #allocation2 [shape = 'bf16[10,18,8]{2,1,0:T(8,128)(2,1)}', space=vmem, size = 0xf000, scoped, tag = 'scratch operand']
  #allocation3 [shape = 'bf16[8,16,72]{2,1,0:T(8,128)(2,1)}', space=vmem, size = 0x8000, scoped, tag = 'scratch operand']
  %s0 = inlined_call_operand.vmem [shape: bf16[2,16,16,8], index: 0, kind: input, shape index: {}]
  %s1 = inlined_call_operand.vmem [shape: bf16[2,16,16,8], index: 1, kind: input, shape index: {}]
  %s2 = inlined_call_operand.vmem [shape: bf16[2,16,16,8], index: 2, kind: input, shape index: {}]
  %s3 = inlined_call_operand.vmem [shape: bf16[16,72], index: 3, kind: input, shape index: {}]
  %s4 = inlined_call_operand.vmem [shape: f32[16,1], index: 4, kind: input, shape index: {}]
  %s5 = inlined_call_operand.hbm [shape: bf16[2,8,256], index: 5, kind: output, shape index: {}]
  %s6 = sld [smem:[#allocation0]]
  $region53: #{tpu_custom_call.1} parent=0
    _
  %s8 = ssub.s32 1, %s6
  %s9 = scalar_select 0, %s8, %s6
  $region1: #{tpu_custom_call.1} parent=0
    #allocation4 [shape = 'u8[4096]{0}', space=vmem, size = 0x1000, scoped, tag = 'output window, operand 0']
    #allocation5 [shape = 's32[2]{0}', space=sflag, size = 0x8, scoped, tag = 'scoped memory for tpu_custom_call.1']
    %10 = vsyncpa [#allocation5], 0
    %s11 = scalar_lea.sflag [#allocation5], 1
    %12 = vsyncpa %s11, 0
    loop: start=0, step=1, limit=6
    $region2: #{tpu_custom_call.1} parent=1 // loop_pre_header
      _
    $region3: #{tpu_custom_call.1} parent=1 // loop_header
      %s14 = sphi 0, %s18
      %p15 = scmp.ge.s32.totalorder %s14, 6
      %s21 = sphi 0, %s33
      %s22 = sphi 0, %s29
      %s23 = sphi 0, %s21
      %s24 = sphi 0, %s22
      %s25 = sphi 0, %s23
      %s26 = sphi 0, %s24
      %s38 = sphi 0, %s40
      %s41 = sphi 0, %s38
      %s42 = sphi 0, %s41
      %s58 = sphi 0, %s42
      %s74 = sphi 0, %s76
      %s77 = sphi 0, %s74
      %s78 = sphi 0, %s77
      %s94 = sphi 0, %s78
      %s110 = sphi 0, %s112
      %s113 = sphi 0, %s110
      %s114 = sphi 0, %s113
      %s130 = sphi 0, %s114
      %s134 = sphi 0, %s134
      %s136 = sphi 0, %s134
      %s137 = sphi 0, %s136
      %s151 = sphi 0, %s137
      %s155 = sphi 0, %s155
      %s157 = sphi 0, %s155
      %s158 = sphi 0, %s157
      %s172 = sphi 0, %s158
      %s180 = sphi 0, %s182
      %s183 = sphi 0, %s180
      %s184 = sphi 0, %s183
      %s200 = sphi 0, %s184
    $region4: #{tpu_custom_call.1} parent=1 // loop_header_branch
      %17 = sbr.rel (%p15) target = $region8
    $region5: #{tpu_custom_call.1} parent=1 // loop_body
      %s19 = ssub.s32 %s14, 1
      %s20 = ssub.s32 %s14, 2
      %s27 = sadd.s32 1, %s22
      %p28 = scmp.ge.s32.totalorder %s27, 2
      %s29 = scalar_select %p28, 0, %s27
      %s30 = sadd.s32 1, %s21
      %s31 = scalar_select %p28, %s30, %s21
      %p32 = scmp.ge.s32.totalorder %s31, 2
      %s33 = scalar_select %p32, 0, %s31
      %s34 = ssub.s32 %s21, %s33
      %s35 = ssub.s32 %s22, %s29
      %s36 = sor.u32 %s34, %s35
      %p37 = scmp.eq.s32.totalorder %s36, 0
      %s39 = sadd.s32 %s38, 1
      %s40 = scalar_select %p37, %s38, %s39
      %p43 = pneg %p37
      %p44 = scmp.eq.s32.totalorder %s14, 3
      %p45 = por %p43, %p44
      %p46 = scmp.ne.s32.totalorder %s38, %s41
      %p47 = scmp.eq.s32.totalorder %s14, 0
      %p48 = por %p46, %p47
      %p49 = scmp.ne.s32.totalorder %s38, %s41
      %p50 = scmp.eq.s32.totalorder %s19, 3
      %p51 = por %p49, %p50
      %p52 = scmp.ne.s32.totalorder %s41, %s42
      %p53 = scmp.eq.s32.totalorder %s19, 0
      %p54 = por %p52, %p53
      %p55 = scmp.ne.s32.totalorder %s41, %s42
      %p56 = scmp.eq.s32.totalorder %s20, 3
      %p57 = por %p55, %p56
      %p59 = scmp.ne.s32.totalorder %s42, %s58
      %p60 = scmp.eq.s32.totalorder %s20, 0
      %p61 = por %p59, %p60
      %s62 = smul.u32 %s22, 8
      %s63 = ssub.s32 %s62, 1
      %p64 = scmp.gt.s32.totalorder %s63, 0
      %s65 = scalar_select %p64, %s63, 0
      %s66 = smul.u32 %s29, 8
      %s67 = ssub.s32 %s66, 1
      %p68 = scmp.gt.s32.totalorder %s67, 0
      %s69 = scalar_select %p68, %s67, 0
      %s70 = ssub.s32 %s21, %s33
      %s71 = ssub.s32 %s65, %s69
      %s72 = sor.u32 %s70, %s71
      %p73 = scmp.eq.s32.totalorder %s72, 0
      %s75 = sadd.s32 %s74, 1
      %s76 = scalar_select %p73, %s74, %s75
      %p79 = pneg %p73
      %p80 = scmp.eq.s32.totalorder %s14, 3
      %p81 = por %p79, %p80
      %p82 = scmp.ne.s32.totalorder %s74, %s77
      %p83 = scmp.eq.s32.totalorder %s14, 0
      %p84 = por %p82, %p83
      %p85 = scmp.ne.s32.totalorder %s74, %s77
      %p86 = scmp.eq.s32.totalorder %s19, 3
      %p87 = por %p85, %p86
      %p88 = scmp.ne.s32.totalorder %s77, %s78
      %p89 = scmp.eq.s32.totalorder %s19, 0
      %p90 = por %p88, %p89
      %p91 = scmp.ne.s32.totalorder %s77, %s78
      %p92 = scmp.eq.s32.totalorder %s20, 3
      %p93 = por %p91, %p92
      %p95 = scmp.ne.s32.totalorder %s78, %s94
      %p96 = scmp.eq.s32.totalorder %s20, 0
      %p97 = por %p95, %p96
      %s98 = sadd.s32 %s22, 1
      %s99 = smul.u32 %s98, 8
      %p100 = scmp.lt.s32.totalorder %s99, 15
      %s101 = scalar_select %p100, %s99, 15
      %s102 = sadd.s32 %s29, 1
      %s103 = smul.u32 %s102, 8
      %p104 = scmp.lt.s32.totalorder %s103, 15
      %s105 = scalar_select %p104, %s103, 15
      %s106 = ssub.s32 %s21, %s33
      %s107 = ssub.s32 %s101, %s105
      %s108 = sor.u32 %s106, %s107
      %p109 = scmp.eq.s32.totalorder %s108, 0
      %s111 = sadd.s32 %s110, 1
      %s112 = scalar_select %p109, %s110, %s111
      %p115 = pneg %p109
      %p116 = scmp.eq.s32.totalorder %s14, 3
      %p117 = por %p115, %p116
      %p118 = scmp.ne.s32.totalorder %s110, %s113
      %p119 = scmp.eq.s32.totalorder %s14, 0
      %p120 = por %p118, %p119
      %p121 = scmp.ne.s32.totalorder %s110, %s113
      %p122 = scmp.eq.s32.totalorder %s19, 3
      %p123 = por %p121, %p122
      %p124 = scmp.ne.s32.totalorder %s113, %s114
      %p125 = scmp.eq.s32.totalorder %s19, 0
      %p126 = por %p124, %p125
      %p127 = scmp.ne.s32.totalorder %s113, %s114
      %p128 = scmp.eq.s32.totalorder %s20, 3
      %p129 = por %p127, %p128
      %p131 = scmp.ne.s32.totalorder %s114, %s130
      %p132 = scmp.eq.s32.totalorder %s20, 0
      %p133 = por %p131, %p132
      %s135 = sadd.s32 %s134, 1
      %p138 = scmp.eq.s32.totalorder %s14, 3
      %p139 = scmp.ne.s32.totalorder %s134, %s136
      %p140 = scmp.eq.s32.totalorder %s14, 0
      %p141 = por %p139, %p140
      %p142 = scmp.ne.s32.totalorder %s134, %s136
      %p143 = scmp.eq.s32.totalorder %s19, 3
      %p144 = por %p142, %p143
      %p145 = scmp.ne.s32.totalorder %s136, %s137
      %p146 = scmp.eq.s32.totalorder %s19, 0
      %p147 = por %p145, %p146
      %p148 = scmp.ne.s32.totalorder %s136, %s137
      %p149 = scmp.eq.s32.totalorder %s20, 3
      %p150 = por %p148, %p149
      %p152 = scmp.ne.s32.totalorder %s137, %s151
      %p153 = scmp.eq.s32.totalorder %s20, 0
      %p154 = por %p152, %p153
      %s156 = sadd.s32 %s155, 1
      %p159 = scmp.eq.s32.totalorder %s14, 3
      %p160 = scmp.ne.s32.totalorder %s155, %s157
      %p161 = scmp.eq.s32.totalorder %s14, 0
      %p162 = por %p160, %p161
      %p163 = scmp.ne.s32.totalorder %s155, %s157
      %p164 = scmp.eq.s32.totalorder %s19, 3
      %p165 = por %p163, %p164
      %p166 = scmp.ne.s32.totalorder %s157, %s158
      %p167 = scmp.eq.s32.totalorder %s19, 0
      %p168 = por %p166, %p167
      %p169 = scmp.ne.s32.totalorder %s157, %s158
      %p170 = scmp.eq.s32.totalorder %s20, 3
      %p171 = por %p169, %p170
      %p173 = scmp.ne.s32.totalorder %s158, %s172
      %p174 = scmp.eq.s32.totalorder %s20, 0
      %p175 = por %p173, %p174
      %s176 = ssub.s32 %s21, %s33
      %s177 = ssub.s32 %s22, %s29
      %s178 = sor.u32 %s176, %s177
      %p179 = scmp.eq.s32.totalorder %s178, 0
      %s181 = sadd.s32 %s180, 1
      %s182 = scalar_select %p179, %s180, %s181
      %p185 = pneg %p179
      %p186 = scmp.eq.s32.totalorder %s14, 3
      %p187 = por %p185, %p186
      %p188 = scmp.ne.s32.totalorder %s180, %s183
      %p189 = scmp.eq.s32.totalorder %s14, 0
      %p190 = por %p188, %p189
      %p191 = scmp.ne.s32.totalorder %s180, %s183
      %p192 = scmp.eq.s32.totalorder %s19, 3
      %p193 = por %p191, %p192
      %p194 = scmp.ne.s32.totalorder %s183, %s184
      %p195 = scmp.eq.s32.totalorder %s19, 0
      %p196 = por %p194, %p195
      %p197 = scmp.ne.s32.totalorder %s183, %s184
      %p198 = scmp.eq.s32.totalorder %s20, 3
      %p199 = por %p197, %p198
      %p201 = scmp.ne.s32.totalorder %s184, %s200
      %p202 = scmp.eq.s32.totalorder %s20, 0
      %p203 = por %p201, %p202
      %p204 = scmp.le.s32.totalorder 1, %s14
      %p205 = scmp.lt.s32.totalorder %s14, 5
      %p206 = pnand %p204, %p205
      %p207 = pneg %p206
      // Predicated region
      $region9: #{tpu_custom_call.1} parent=5 // pred_check
        _
      $region10: #{tpu_custom_call.1} parent=5 // pred_check_branch
        %209 = sbr.rel (%p206) target = $region12
      $region11: #{tpu_custom_call.1} parent=5 // pred_region
        %s210 = ssub.s32 %s14, 1
        // Predicated region
        $region13: #{tpu_custom_call.1} parent=11 // pred_check
          %p211 = pneg %p147
        $region14: #{tpu_custom_call.1} parent=11 // pred_check_branch
          %213 = sbr.rel (%p211) target = $region16
        $region15: #{tpu_custom_call.1} parent=11 // pred_region
          _
        $region16: #{tpu_custom_call.1} parent=11 // pred_fallthru
          _
        // Predicated region
        $region17: #{tpu_custom_call.1} parent=11 // pred_check
          %p214 = pneg %p168
        $region18: #{tpu_custom_call.1} parent=11 // pred_check_branch
          %216 = sbr.rel (%p214) target = $region20
        $region19: #{tpu_custom_call.1} parent=11 // pred_region
          _
        $region20: #{tpu_custom_call.1} parent=11 // pred_fallthru
          _
      $region12: #{tpu_custom_call.1} parent=5 // pred_fallthru
        _
      %p217 = scmp.lt.s32.totalorder %s14, 4
      // Predicated region
      $region21: #{tpu_custom_call.1} parent=5 // pred_check
        %p218 = pneg %p217
      $region22: #{tpu_custom_call.1} parent=5 // pred_check_branch
        %220 = sbr.rel (%p218) target = $region24
      $region23: #{tpu_custom_call.1} parent=5 // pred_region
        // Predicated region
        $region25: #{tpu_custom_call.1} parent=23 // pred_check
          %p221 = pneg %p48
        $region26: #{tpu_custom_call.1} parent=23 // pred_check_branch
          %223 = sbr.rel (%p221) target = $region28
        $region27: #{tpu_custom_call.1} parent=23 // pred_region
          %s224 = smul.u32 8, %s22
          %p225 = scmp.lt.s32.totalorder %s21, 1
          %s226 = scalar_select %p225, %s21, 1
          %p227 = scmp.lt.s32.totalorder %s224, 15
          %s228 = scalar_select %p227, %s224, 15
          %s229 = smul.addr %s228, 2
          %s230 = smul.addr %s226, 32
          %s231 = sadd.s32 %s229, %s230
          %s232 = smul.addr %s231, 4
          %s233 = scalar_lea.vmem %s0, %s232
          %s234 = smul.u32 8, %s22
        $region28: #{tpu_custom_call.1} parent=23 // pred_fallthru
          _
        // Predicated region
        $region29: #{tpu_custom_call.1} parent=23 // pred_check
          %p235 = pneg %p84
        $region30: #{tpu_custom_call.1} parent=23 // pred_check_branch
          %237 = sbr.rel (%p235) target = $region32
        $region31: #{tpu_custom_call.1} parent=23 // pred_region
          %s238 = smul.u32 %s22, 8
          %s239 = ssub.s32 %s238, 1
          %p240 = scmp.gt.s32.totalorder %s239, 0
          %s241 = scalar_select %p240, %s239, 0
          %p242 = scmp.lt.s32.totalorder %s21, 1
          %s243 = scalar_select %p242, %s21, 1
          %p244 = scmp.lt.s32.totalorder %s241, 15
          %s245 = scalar_select %p244, %s241, 15
          %s246 = smul.addr %s245, 2
          %s247 = smul.addr %s243, 32
          %s248 = sadd.s32 %s246, %s247
          %s249 = smul.addr %s248, 4
          %s250 = scalar_lea.vmem %s1, %s249
          %s251 = smul.u32 %s22, 8
          %s252 = ssub.s32 %s251, 1
          %p253 = scmp.gt.s32.totalorder %s252, 0
          %s254 = scalar_select %p253, %s252, 0
        $region32: #{tpu_custom_call.1} parent=23 // pred_fallthru
          _
        // Predicated region
        $region33: #{tpu_custom_call.1} parent=23 // pred_check
          %p255 = pneg %p120
        $region34: #{tpu_custom_call.1} parent=23 // pred_check_branch
          %257 = sbr.rel (%p255) target = $region36
        $region35: #{tpu_custom_call.1} parent=23 // pred_region
          %s258 = sadd.s32 %s22, 1
          %s259 = smul.u32 %s258, 8
          %p260 = scmp.lt.s32.totalorder %s259, 15
          %s261 = scalar_select %p260, %s259, 15
          %p262 = scmp.lt.s32.totalorder %s21, 1
          %s263 = scalar_select %p262, %s21, 1
          %p264 = scmp.lt.s32.totalorder %s261, 15
          %s265 = scalar_select %p264, %s261, 15
          %s266 = smul.addr %s265, 2
          %s267 = smul.addr %s263, 32
          %s268 = sadd.s32 %s266, %s267
          %s269 = smul.addr %s268, 4
          %s270 = scalar_lea.vmem %s2, %s269
          %s271 = sadd.s32 %s22, 1
          %s272 = smul.u32 %s271, 8
          %p273 = scmp.lt.s32.totalorder %s272, 15
          %s274 = scalar_select %p273, %s272, 15
        $region36: #{tpu_custom_call.1} parent=23 // pred_fallthru
          _
      $region24: #{tpu_custom_call.1} parent=5 // pred_fallthru
        _
      %p275 = scmp.le.s32.totalorder 1, %s14
      %p276 = scmp.lt.s32.totalorder %s14, 5
      %p277 = pnand %p275, %p276
      %p278 = pneg %p277
      // Predicated region
      $region37: #{tpu_custom_call.1} parent=5 // pred_check
        _
      $region38: #{tpu_custom_call.1} parent=5 // pred_check_branch
        %280 = sbr.rel (%p277) target = $region40
      $region39: #{tpu_custom_call.1} parent=5 // pred_region
        %s281 = ssub.s32 %s14, 1
        %s282 = smul.u32 8, %s24
        %p283 = scmp.lt.s32.totalorder %s23, 1
        %s284 = scalar_select %p283, %s23, 1
        %p285 = scmp.lt.s32.totalorder %s282, 15
        %s286 = scalar_select %p285, %s282, 15
        %s287 = smul.addr %s286, 2
        %s288 = smul.addr %s284, 32
        %s289 = sadd.s32 %s287, %s288
        %s290 = smul.addr %s289, 4
        %s291 = scalar_lea.vmem %s0, %s290
        %p292 = pneg %p54
        %p293 = pneg %p51
        %s294 = smul.u32 %s24, 8
        %s295 = ssub.s32 %s294, 1
        %p296 = scmp.gt.s32.totalorder %s295, 0
        %s297 = scalar_select %p296, %s295, 0
        %p298 = scmp.lt.s32.totalorder %s23, 1
        %s299 = scalar_select %p298, %s23, 1
        %p300 = scmp.lt.s32.totalorder %s297, 15
        %s301 = scalar_select %p300, %s297, 15
        %s302 = smul.addr %s301, 2
        %s303 = smul.addr %s299, 32
        %s304 = sadd.s32 %s302, %s303
        %s305 = smul.addr %s304, 4
        %s306 = scalar_lea.vmem %s1, %s305
        %p307 = pneg %p90
        %p308 = pneg %p87
        %s309 = sadd.s32 %s24, 1
        %s310 = smul.u32 %s309, 8
        %p311 = scmp.lt.s32.totalorder %s310, 15
        %s312 = scalar_select %p311, %s310, 15
        %p313 = scmp.lt.s32.totalorder %s23, 1
        %s314 = scalar_select %p313, %s23, 1
        %p315 = scmp.lt.s32.totalorder %s312, 15
        %s316 = scalar_select %p315, %s312, 15
        %s317 = smul.addr %s316, 2
        %s318 = smul.addr %s314, 32
        %s319 = sadd.s32 %s317, %s318
        %s320 = smul.addr %s319, 4
        %s321 = scalar_lea.vmem %s2, %s320
        %p322 = pneg %p126
        %p323 = pneg %p123
        %p324 = pneg %p147
        %p325 = pneg %p144
        %p326 = pneg %p168
        %p327 = pneg %p165
        %p328 = pneg %p196
        %p329 = pneg %p193
        %s330 = sand.u32 %s183, 1
        %s331 = scalar_lea.sflag [#allocation5], %s330
        %s332 = sand.u32 %s183, 1
        %s333 = smul.addr %s332, 4
        %s334 = scalar_lea.vmem [#allocation4], %s333
        %s335 = smul.u32 8, %s24
        %p336 = scmp.lt.s32.totalorder %s23, 1
        %s337 = scalar_select %p336, %s23, 1
        %p338 = scmp.lt.s32.totalorder %s335, 15
        %s339 = scalar_select %p338, %s335, 15
        %s340 = smul.addr %s339, 2
        %s341 = smul.addr %s337, 32
        %s342 = sadd.s32 %s340, %s341
        %s343 = smul.addr %s342, 4
        %s344 = scalar_lea.vmem %s0, %s343
        %s345 = smul.u32 8, %s24
        %s346 = smul.u32 %s24, 8
        %s347 = ssub.s32 %s346, 1
        %p348 = scmp.gt.s32.totalorder %s347, 0
        %s349 = scalar_select %p348, %s347, 0
        %p350 = scmp.lt.s32.totalorder %s23, 1
        %s351 = scalar_select %p350, %s23, 1
        %p352 = scmp.lt.s32.totalorder %s349, 15
        %s353 = scalar_select %p352, %s349, 15
        %s354 = smul.addr %s353, 2
        %s355 = smul.addr %s351, 32
        %s356 = sadd.s32 %s354, %s355
        %s357 = smul.addr %s356, 4
        %s358 = scalar_lea.vmem %s1, %s357
        %s359 = smul.u32 %s24, 8
        %s360 = ssub.s32 %s359, 1
        %p361 = scmp.gt.s32.totalorder %s360, 0
        %s362 = scalar_select %p361, %s360, 0
        %s363 = sadd.s32 %s24, 1
        %s364 = smul.u32 %s363, 8
        %p365 = scmp.lt.s32.totalorder %s364, 15
        %s366 = scalar_select %p365, %s364, 15
        %p367 = scmp.lt.s32.totalorder %s23, 1
        %s368 = scalar_select %p367, %s23, 1
        %p369 = scmp.lt.s32.totalorder %s366, 15
        %s370 = scalar_select %p369, %s366, 15
        %s371 = smul.addr %s370, 2
        %s372 = smul.addr %s368, 32
        %s373 = sadd.s32 %s371, %s372
        %s374 = smul.addr %s373, 4
        %s375 = scalar_lea.vmem %s2, %s374
        %s376 = sadd.s32 %s24, 1
        %s377 = smul.u32 %s376, 8
        %p378 = scmp.lt.s32.totalorder %s377, 15
        %s379 = scalar_select %p378, %s377, 15
        %vm381 = vcmask 57344
        %vm382 = vsmask.f32 256
        %vm383 = vmand %vm381, %vm382
        %v384 = vld [vmem:[#allocation2] sm:$0x1]
        %v385 = vsel %vm383, 0, %v384
        %386 = vst [vmem:[#allocation2] sm:$0x1] %v385
        %v387 = vld [vmem:[#allocation2 + $0xc] sm:$0x1]
        %v388 = vsel %vm383, 0, %v387
        %389 = vst [vmem:[#allocation2 + $0xc] sm:$0x1] %v388
        %v390 = vld [vmem:[#allocation2 + $0x18] sm:$0x1]
        %v391 = vsel %vm383, 0, %v390
        %392 = vst [vmem:[#allocation2 + $0x18] sm:$0x1] %v391
        %v393 = vld [vmem:[#allocation2 + $0x24] sm:$0x1]
        %v394 = vsel %vm383, 0, %v393
        %395 = vst [vmem:[#allocation2 + $0x24] sm:$0x1] %v394
        %v396 = vld [vmem:[#allocation2 + $0x30] sm:$0x1]
        %v397 = vsel %vm383, 0, %v396
        %398 = vst [vmem:[#allocation2 + $0x30] sm:$0x1] %v397
        %v399 = vld [vmem:[#allocation2 + $0x3c] sm:$0x1]
        %v400 = vsel %vm383, 0, %v399
        %401 = vst [vmem:[#allocation2 + $0x3c] sm:$0x1] %v400
        %v402 = vld [vmem:[#allocation2 + $0x48] sm:$0x1]
        %v403 = vsel %vm383, 0, %v402
        %404 = vst [vmem:[#allocation2 + $0x48] sm:$0x1] %v403
        %v405 = vld [vmem:[#allocation2 + $0x54] sm:$0x1]
        %v406 = vsel %vm383, 0, %v405
        %407 = vst [vmem:[#allocation2 + $0x54] sm:$0x1] %v406
        %v408 = vld [vmem:[#allocation2 + $0x60] sm:$0x1]
        %v409 = vsel %vm383, 0, %v408
        %410 = vst [vmem:[#allocation2 + $0x60] sm:$0x1] %v409
        %v411 = vld [vmem:[#allocation2 + $0x6c] sm:$0x1]
        %v412 = vsel %vm383, 0, %v411
        %413 = vst [vmem:[#allocation2 + $0x6c] sm:$0x1] %v412
        %vm414 = vsmask.f32 7938
        %vm415 = vmand %vm381, %vm414
        %v416 = vld [vmem:[#allocation2 + $0x8] sm:$0x1]
        %v417 = vsel %vm415, 0, %v416
        %418 = vst [vmem:[#allocation2 + $0x8] sm:$0x1] %v417
        %v419 = vld [vmem:[#allocation2 + $0x14] sm:$0x1]
        %v420 = vsel %vm415, 0, %v419
        %421 = vst [vmem:[#allocation2 + $0x14] sm:$0x1] %v420
        %v422 = vld [vmem:[#allocation2 + $0x20] sm:$0x1]
        %v423 = vsel %vm415, 0, %v422
        %424 = vst [vmem:[#allocation2 + $0x20] sm:$0x1] %v423
        %v425 = vld [vmem:[#allocation2 + $0x2c] sm:$0x1]
        %v426 = vsel %vm415, 0, %v425
        %427 = vst [vmem:[#allocation2 + $0x2c] sm:$0x1] %v426
        %v428 = vld [vmem:[#allocation2 + $0x38] sm:$0x1]
        %v429 = vsel %vm415, 0, %v428
        %430 = vst [vmem:[#allocation2 + $0x38] sm:$0x1] %v429
        %v431 = vld [vmem:[#allocation2 + $0x44] sm:$0x1]
        %v432 = vsel %vm415, 0, %v431
        %433 = vst [vmem:[#allocation2 + $0x44] sm:$0x1] %v432
        %v434 = vld [vmem:[#allocation2 + $0x50] sm:$0x1]
        %v435 = vsel %vm415, 0, %v434
        %436 = vst [vmem:[#allocation2 + $0x50] sm:$0x1] %v435
        %v437 = vld [vmem:[#allocation2 + $0x5c] sm:$0x1]
        %v438 = vsel %vm415, 0, %v437
        %439 = vst [vmem:[#allocation2 + $0x5c] sm:$0x1] %v438
        %v440 = vld [vmem:[#allocation2 + $0x68] sm:$0x1]
        %v441 = vsel %vm415, 0, %v440
        %442 = vst [vmem:[#allocation2 + $0x68] sm:$0x1] %v441
        %v443 = vld [vmem:[#allocation2 + $0x74] sm:$0x1]
        %v444 = vsel %vm415, 0, %v443
        %445 = vst [vmem:[#allocation2 + $0x74] sm:$0x1] %v444
        %p446 = scmp.gt.s32.totalorder %s24, 0
        %v447 = vld [vmem:[%s358] sm:$0xf]
        %v448 = vld [vmem:[%s358 + $0x4] sm:$0xf]
        %s449 = scalar_select %p446, 1, 0
        %v450 = vstv %s449
        %vm451 = vcmp.eq.s32.totalorder %v450, 1
        %v452 = vsel %vm451, %v447, 0
        %v453 = vsel %vm451, %v448, 0
        %vm454 = vsmask.f32 4368
        %vm455 = vmor %vm382, %vm454
        %v457 = vshrl.u32 %v452, 16
        %v459 = vrot.slane %v457, 7
        %v460 = vshll.u32 %v452, 16
        %v462 = vor.u32 %v459, %v460
        %v463 = vrot.slane %v459, 4
        %v465 = vshrl.u32 %v453, 16
        %v467 = vrot.slane %v465, 7
        %v468 = vshll.u32 %v453, 16
        %v470 = vor.u32 %v467, %v468
        %v471 = vsel %vm455, %v463, %v470
        %v472 = vrot.slane %v467, 4
        %vm476 = vcmask 60416
        %vm477 = vmand %vm476, %vm414
        %v478 = vld [vmem:[#allocation2] sm:$0xf]
        %v479 = vsel %vm477, %v462, %v478
        %480 = vst [vmem:[#allocation2] sm:$0xf] %v479
        %vm481 = vcmask 60416
        %482 = vst.msk [vmem:[#allocation2 + $0x4] sm:$0xf] %vm481, %v471
        %v483 = vld [vmem:[#allocation2 + $0x8] sm:$0x1]
        %v484 = vsel %vm383, %v472, %v483
        %485 = vst [vmem:[#allocation2 + $0x8] sm:$0x1] %v484
        %p486 = scmp.lt.s32.totalorder %s24, 1
        %v487 = vld [vmem:[%s375] sm:$0xf]
        %v488 = vld [vmem:[%s375 + $0x4] sm:$0xf]
        %s489 = scalar_select %p486, 1, 0
        %v490 = vstv %s489
        %vm491 = vcmp.eq.s32.totalorder %v490, 1
        %v492 = vsel %vm491, %v487, 0
        %v493 = vsel %vm491, %v488, 0
        %v495 = vshrl.u32 %v492, 16
        %v497 = vrot.slane %v495, 7
        %v498 = vshll.u32 %v492, 16
        %v500 = vor.u32 %v497, %v498
        %v501 = vrot.slane %v497, 4
        %v503 = vshrl.u32 %v493, 16
        %v505 = vrot.slane %v503, 7
        %v506 = vshll.u32 %v493, 16
        %v508 = vor.u32 %v505, %v506
        %v509 = vsel %vm455, %v501, %v508
        %v510 = vrot.slane %v505, 4
        %s514 = scalar_lea.vmem [#allocation2], 108
        %v515 = vld [vmem:[%s514] sm:$0xf]
        %v516 = vsel %vm477, %v500, %v515
        %517 = vst [vmem:[%s514] sm:$0xf] %v516
        %518 = vst.msk [vmem:[%s514 + $0x4] sm:$0xf] %vm481, %v509
        %v519 = vld [vmem:[%s514 + $0x8] sm:$0x1]
        %v520 = vsel %vm383, %v510, %v519
        %521 = vst [vmem:[%s514 + $0x8] sm:$0x1] %v520
        %v522 = vld [vmem:[%s344] sm:$0xf]
        %v523 = vld [vmem:[%s344 + $0x4] sm:$0xf]
        %v524 = vld [vmem:[%s344 + $0x8] sm:$0xf]
        %v525 = vld [vmem:[%s344 + $0xc] sm:$0xf]
        %v526 = vld [vmem:[%s344 + $0x10] sm:$0xf]
        %v527 = vld [vmem:[%s344 + $0x14] sm:$0xf]
        %v528 = vld [vmem:[%s344 + $0x18] sm:$0xf]
        %v529 = vld [vmem:[%s344 + $0x1c] sm:$0xf]
        %v530 = vld [vmem:[%s344 + $0x20] sm:$0xf]
        %v531 = vld [vmem:[%s344 + $0x24] sm:$0xf]
        %v532 = vld [vmem:[%s344 + $0x28] sm:$0xf]
        %v533 = vld [vmem:[%s344 + $0x2c] sm:$0xf]
        %v534 = vld [vmem:[%s344 + $0x30] sm:$0xf]
        %v535 = vld [vmem:[%s344 + $0x34] sm:$0xf]
        %v536 = vld [vmem:[%s344 + $0x38] sm:$0xf]
        %v537 = vld [vmem:[%s344 + $0x3c] sm:$0xf]
        %v539 = vshrl.u32 %v522, 16
        %v541 = vrot.slane %v539, 7
        %v542 = vshll.u32 %v522, 16
        %v544 = vor.u32 %v541, %v542
        %v545 = vrot.slane %v541, 4
        %v547 = vshrl.u32 %v523, 16
        %v549 = vrot.slane %v547, 7
        %v550 = vshll.u32 %v523, 16
        %v552 = vor.u32 %v549, %v550
        %v553 = vsel %vm455, %v545, %v552
        %v554 = vrot.slane %v549, 4
        %v556 = vshrl.u32 %v524, 16
        %v558 = vrot.slane %v556, 7
        %v559 = vshll.u32 %v524, 16
        %v561 = vor.u32 %v558, %v559
        %v562 = vrot.slane %v558, 4
        %v564 = vshrl.u32 %v525, 16
        %v566 = vrot.slane %v564, 7
        %v567 = vshll.u32 %v525, 16
        %v569 = vor.u32 %v566, %v567
        %v570 = vsel %vm455, %v562, %v569
        %v571 = vrot.slane %v566, 4
        %v573 = vshrl.u32 %v526, 16
        %v575 = vrot.slane %v573, 7
        %v576 = vshll.u32 %v526, 16
        %v578 = vor.u32 %v575, %v576
        %v579 = vrot.slane %v575, 4
        %v581 = vshrl.u32 %v527, 16
        %v583 = vrot.slane %v581, 7
        %v584 = vshll.u32 %v527, 16
        %v586 = vor.u32 %v583, %v584
        %v587 = vsel %vm455, %v579, %v586
        %v588 = vrot.slane %v583, 4
        %v590 = vshrl.u32 %v528, 16
        %v592 = vrot.slane %v590, 7
        %v593 = vshll.u32 %v528, 16
        %v595 = vor.u32 %v592, %v593
        %v596 = vrot.slane %v592, 4
        %v598 = vshrl.u32 %v529, 16
        %v600 = vrot.slane %v598, 7
        %v601 = vshll.u32 %v529, 16
        %v603 = vor.u32 %v600, %v601
        %v604 = vsel %vm455, %v596, %v603
        %v605 = vrot.slane %v600, 4
        %v607 = vshrl.u32 %v530, 16
        %v609 = vrot.slane %v607, 7
        %v610 = vshll.u32 %v530, 16
        %v612 = vor.u32 %v609, %v610
        %v613 = vrot.slane %v609, 4
        %v615 = vshrl.u32 %v531, 16
        %v617 = vrot.slane %v615, 7
        %v618 = vshll.u32 %v531, 16
        %v620 = vor.u32 %v617, %v618
        %v621 = vsel %vm455, %v613, %v620
        %v622 = vrot.slane %v617, 4
        %v624 = vshrl.u32 %v532, 16
        %v626 = vrot.slane %v624, 7
        %v627 = vshll.u32 %v532, 16
        %v629 = vor.u32 %v626, %v627
        %v630 = vrot.slane %v626, 4
        %v632 = vshrl.u32 %v533, 16
        %v634 = vrot.slane %v632, 7
        %v635 = vshll.u32 %v533, 16
        %v637 = vor.u32 %v634, %v635
        %v638 = vsel %vm455, %v630, %v637
        %v639 = vrot.slane %v634, 4
        %v641 = vshrl.u32 %v534, 16
        %v643 = vrot.slane %v641, 7
        %v644 = vshll.u32 %v534, 16
        %v646 = vor.u32 %v643, %v644
        %v647 = vrot.slane %v643, 4
        %v649 = vshrl.u32 %v535, 16
        %v651 = vrot.slane %v649, 7
        %v652 = vshll.u32 %v535, 16
        %v654 = vor.u32 %v651, %v652
        %v655 = vsel %vm455, %v647, %v654
        %v656 = vrot.slane %v651, 4
        %v658 = vshrl.u32 %v536, 16
        %v660 = vrot.slane %v658, 7
        %v661 = vshll.u32 %v536, 16
        %v663 = vor.u32 %v660, %v661
        %v664 = vrot.slane %v660, 4
        %v666 = vshrl.u32 %v537, 16
        %v668 = vrot.slane %v666, 7
        %v669 = vshll.u32 %v537, 16
        %v671 = vor.u32 %v668, %v669
        %v672 = vsel %vm455, %v664, %v671
        %v673 = vrot.slane %v668, 4
        %s698 = scalar_lea.vmem [#allocation2], 12
        %v699 = vld [vmem:[%s698] sm:$0xf]
        %v700 = vsel %vm477, %v544, %v699
        %701 = vst [vmem:[%s698] sm:$0xf] %v700
        %702 = vst.msk [vmem:[%s698 + $0x4] sm:$0xf] %vm481, %v553
        %v703 = vld [vmem:[%s698 + $0x8] sm:$0x1]
        %v704 = vsel %vm383, %v554, %v703
        %705 = vst [vmem:[%s698 + $0x8] sm:$0x1] %v704
        %v706 = vld [vmem:[%s698 + $0xc] sm:$0xf]
        %v707 = vsel %vm477, %v561, %v706
        %708 = vst [vmem:[%s698 + $0xc] sm:$0xf] %v707
        %709 = vst.msk [vmem:[%s698 + $0x10] sm:$0xf] %vm481, %v570
        %v710 = vld [vmem:[%s698 + $0x14] sm:$0x1]
        %v711 = vsel %vm383, %v571, %v710
        %712 = vst [vmem:[%s698 + $0x14] sm:$0x1] %v711
        %v713 = vld [vmem:[%s698 + $0x18] sm:$0xf]
        %v714 = vsel %vm477, %v578, %v713
        %715 = vst [vmem:[%s698 + $0x18] sm:$0xf] %v714
        %716 = vst.msk [vmem:[%s698 + $0x1c] sm:$0xf] %vm481, %v587
        %v717 = vld [vmem:[%s698 + $0x20] sm:$0x1]
        %v718 = vsel %vm383, %v588, %v717
        %719 = vst [vmem:[%s698 + $0x20] sm:$0x1] %v718
        %v720 = vld [vmem:[%s698 + $0x24] sm:$0xf]
        %v721 = vsel %vm477, %v595, %v720
        %722 = vst [vmem:[%s698 + $0x24] sm:$0xf] %v721
        %723 = vst.msk [vmem:[%s698 + $0x28] sm:$0xf] %vm481, %v604
        %v724 = vld [vmem:[%s698 + $0x2c] sm:$0x1]
        %v725 = vsel %vm383, %v605, %v724
        %726 = vst [vmem:[%s698 + $0x2c] sm:$0x1] %v725
        %v727 = vld [vmem:[%s698 + $0x30] sm:$0xf]
        %v728 = vsel %vm477, %v612, %v727
        %729 = vst [vmem:[%s698 + $0x30] sm:$0xf] %v728
        %730 = vst.msk [vmem:[%s698 + $0x34] sm:$0xf] %vm481, %v621
        %v731 = vld [vmem:[%s698 + $0x38] sm:$0x1]
        %v732 = vsel %vm383, %v622, %v731
        %733 = vst [vmem:[%s698 + $0x38] sm:$0x1] %v732
        %v734 = vld [vmem:[%s698 + $0x3c] sm:$0xf]
        %v735 = vsel %vm477, %v629, %v734
        %736 = vst [vmem:[%s698 + $0x3c] sm:$0xf] %v735
        %737 = vst.msk [vmem:[%s698 + $0x40] sm:$0xf] %vm481, %v638
        %v738 = vld [vmem:[%s698 + $0x44] sm:$0x1]
        %v739 = vsel %vm383, %v639, %v738
        %740 = vst [vmem:[%s698 + $0x44] sm:$0x1] %v739
        %v741 = vld [vmem:[%s698 + $0x48] sm:$0xf]
        %v742 = vsel %vm477, %v646, %v741
        %743 = vst [vmem:[%s698 + $0x48] sm:$0xf] %v742
        %744 = vst.msk [vmem:[%s698 + $0x4c] sm:$0xf] %vm481, %v655
        %v745 = vld [vmem:[%s698 + $0x50] sm:$0x1]
        %v746 = vsel %vm383, %v656, %v745
        %747 = vst [vmem:[%s698 + $0x50] sm:$0x1] %v746
        %v748 = vld [vmem:[%s698 + $0x54] sm:$0xf]
        %v749 = vsel %vm477, %v663, %v748
        %750 = vst [vmem:[%s698 + $0x54] sm:$0xf] %v749
        %751 = vst.msk [vmem:[%s698 + $0x58] sm:$0xf] %vm481, %v672
        %v752 = vld [vmem:[%s698 + $0x5c] sm:$0x1]
        %v753 = vsel %vm383, %v673, %v752
        %754 = vst [vmem:[%s698 + $0x5c] sm:$0x1] %v753
        %v755 = vld [vmem:[#allocation2] sm:$0xf]
        %v756 = vld [vmem:[#allocation2 + $0x4] sm:$0xf]
        %v757 = vld [vmem:[#allocation2 + $0xc] sm:$0xf]
        %v758 = vld [vmem:[#allocation2 + $0x10] sm:$0xf]
        %v759 = vld [vmem:[#allocation2 + $0x18] sm:$0xf]
        %v760 = vld [vmem:[#allocation2 + $0x1c] sm:$0xf]
        %v761 = vld [vmem:[#allocation2 + $0x24] sm:$0xf]
        %v762 = vld [vmem:[#allocation2 + $0x28] sm:$0xf]
        %v763 = vld [vmem:[#allocation2 + $0x30] sm:$0xf]
        %v764 = vld [vmem:[#allocation2 + $0x34] sm:$0xf]
        %v765 = vld [vmem:[#allocation2 + $0x3c] sm:$0xf]
        %v766 = vld [vmem:[#allocation2 + $0x40] sm:$0xf]
        %v767 = vld [vmem:[#allocation2 + $0x48] sm:$0xf]
        %v768 = vld [vmem:[#allocation2 + $0x4c] sm:$0xf]
        %v769 = vld [vmem:[#allocation2 + $0x54] sm:$0xf]
        %v770 = vld [vmem:[#allocation2 + $0x58] sm:$0xf]
        %771 = vst.msk [vmem:[#allocation3] sm:$0xf] %vm481, %v755
        %772 = vst.msk [vmem:[#allocation3 + $0x4] sm:$0xf] %vm481, %v756
        %773 = vst.msk [vmem:[#allocation3 + $0x8] sm:$0xf] %vm481, %v757
        %774 = vst.msk [vmem:[#allocation3 + $0xc] sm:$0xf] %vm481, %v758
        %775 = vst.msk [vmem:[#allocation3 + $0x10] sm:$0xf] %vm481, %v759
        %776 = vst.msk [vmem:[#allocation3 + $0x14] sm:$0xf] %vm481, %v760
        %777 = vst.msk [vmem:[#allocation3 + $0x18] sm:$0xf] %vm481, %v761
        %778 = vst.msk [vmem:[#allocation3 + $0x1c] sm:$0xf] %vm481, %v762
        %779 = vst.msk [vmem:[#allocation3 + $0x20] sm:$0xf] %vm481, %v763
        %780 = vst.msk [vmem:[#allocation3 + $0x24] sm:$0xf] %vm481, %v764
        %781 = vst.msk [vmem:[#allocation3 + $0x28] sm:$0xf] %vm481, %v765
        %782 = vst.msk [vmem:[#allocation3 + $0x2c] sm:$0xf] %vm481, %v766
        %783 = vst.msk [vmem:[#allocation3 + $0x30] sm:$0xf] %vm481, %v767
        %784 = vst.msk [vmem:[#allocation3 + $0x34] sm:$0xf] %vm481, %v768
        %785 = vst.msk [vmem:[#allocation3 + $0x38] sm:$0xf] %vm481, %v769
        %786 = vst.msk [vmem:[#allocation3 + $0x3c] sm:$0xf] %vm481, %v770
        %v787 = vld [vmem:[#allocation2] sm:$0xf]
        %v788 = vld [vmem:[#allocation2 + $0x4] sm:$0xf]
        %v789 = vld [vmem:[#allocation2 + $0x8] sm:$0x1]
        %v790 = vld [vmem:[#allocation2 + $0xc] sm:$0xf]
        %v791 = vld [vmem:[#allocation2 + $0x10] sm:$0xf]
        %v792 = vld [vmem:[#allocation2 + $0x14] sm:$0x1]
        %v793 = vld [vmem:[#allocation2 + $0x18] sm:$0xf]
        %v794 = vld [vmem:[#allocation2 + $0x1c] sm:$0xf]
        %v795 = vld [vmem:[#allocation2 + $0x20] sm:$0x1]
        %v796 = vld [vmem:[#allocation2 + $0x24] sm:$0xf]
        %v797 = vld [vmem:[#allocation2 + $0x28] sm:$0xf]
        %v798 = vld [vmem:[#allocation2 + $0x2c] sm:$0x1]
        %v799 = vld [vmem:[#allocation2 + $0x30] sm:$0xf]
        %v800 = vld [vmem:[#allocation2 + $0x34] sm:$0xf]
        %v801 = vld [vmem:[#allocation2 + $0x38] sm:$0x1]
        %v802 = vld [vmem:[#allocation2 + $0x3c] sm:$0xf]
        %v803 = vld [vmem:[#allocation2 + $0x40] sm:$0xf]
        %v804 = vld [vmem:[#allocation2 + $0x44] sm:$0x1]
        %v805 = vld [vmem:[#allocation2 + $0x48] sm:$0xf]
        %v806 = vld [vmem:[#allocation2 + $0x4c] sm:$0xf]
        %v807 = vld [vmem:[#allocation2 + $0x50] sm:$0x1]
        %v808 = vld [vmem:[#allocation2 + $0x54] sm:$0xf]
        %v809 = vld [vmem:[#allocation2 + $0x58] sm:$0xf]
        %v810 = vld [vmem:[#allocation2 + $0x5c] sm:$0x1]
        %vm811 = vsmask.f32 3328
        %vm812 = vsmask.f32 7440
        %vm813 = vmor %vm811, %vm812
        %v815 = vshrl.u32 %v787, 16
        %v817 = vrot.slane %v815, 4
        %v818 = vshll.u32 %v787, 16
        %v820 = vrot.slane %v818, 5
        %v821 = vor.u32 %v817, %v820
        %v822 = vrot.slane %v821, 4
        %v824 = vshll.u32 %v788, 16
        %v826 = vrot.slane %v824, 5
        %v827 = vsel %vm813, %v822, %v826
        %v828 = vshrl.u32 %v788, 16
        %v830 = vrot.slane %v828, 4
        %v831 = vor.u32 %v830, %v826
        %v832 = vrot.slane %v831, 4
        %v834 = vshll.u32 %v789, 16
        %v836 = vrot.slane %v834, 5
        %v837 = vsel %vm813, %v832, %v836
        %v839 = vshrl.u32 %v790, 16
        %v841 = vrot.slane %v839, 4
        %v842 = vshll.u32 %v790, 16
        %v844 = vrot.slane %v842, 5
        %v845 = vor.u32 %v841, %v844
        %v846 = vrot.slane %v845, 4
        %v848 = vshll.u32 %v791, 16
        %v850 = vrot.slane %v848, 5
        %v851 = vsel %vm813, %v846, %v850
        %v852 = vshrl.u32 %v791, 16
        %v854 = vrot.slane %v852, 4
        %v855 = vor.u32 %v854, %v850
        %v856 = vrot.slane %v855, 4
        %v858 = vshll.u32 %v792, 16
        %v860 = vrot.slane %v858, 5
        %v861 = vsel %vm813, %v856, %v860
        %v863 = vshrl.u32 %v793, 16
        %v865 = vrot.slane %v863, 4
        %v866 = vshll.u32 %v793, 16
        %v868 = vrot.slane %v866, 5
        %v869 = vor.u32 %v865, %v868
        %v870 = vrot.slane %v869, 4
        %v872 = vshll.u32 %v794, 16
        %v874 = vrot.slane %v872, 5
        %v875 = vsel %vm813, %v870, %v874
        %v876 = vshrl.u32 %v794, 16
        %v878 = vrot.slane %v876, 4
        %v879 = vor.u32 %v878, %v874
        %v880 = vrot.slane %v879, 4
        %v882 = vshll.u32 %v795, 16
        %v884 = vrot.slane %v882, 5
        %v885 = vsel %vm813, %v880, %v884
        %v887 = vshrl.u32 %v796, 16
        %v889 = vrot.slane %v887, 4
        %v890 = vshll.u32 %v796, 16
        %v892 = vrot.slane %v890, 5
        %v893 = vor.u32 %v889, %v892
        %v894 = vrot.slane %v893, 4
        %v896 = vshll.u32 %v797, 16
        %v898 = vrot.slane %v896, 5
        %v899 = vsel %vm813, %v894, %v898
        %v900 = vshrl.u32 %v797, 16
        %v902 = vrot.slane %v900, 4
        %v903 = vor.u32 %v902, %v898
        %v904 = vrot.slane %v903, 4
        %v906 = vshll.u32 %v798, 16
        %v908 = vrot.slane %v906, 5
        %v909 = vsel %vm813, %v904, %v908
        %v911 = vshrl.u32 %v799, 16
        %v913 = vrot.slane %v911, 4
        %v914 = vshll.u32 %v799, 16
        %v916 = vrot.slane %v914, 5
        %v917 = vor.u32 %v913, %v916
        %v918 = vrot.slane %v917, 4
        %v920 = vshll.u32 %v800, 16
        %v922 = vrot.slane %v920, 5
        %v923 = vsel %vm813, %v918, %v922
        %v924 = vshrl.u32 %v800, 16
        %v926 = vrot.slane %v924, 4
        %v927 = vor.u32 %v926, %v922
        %v928 = vrot.slane %v927, 4
        %v930 = vshll.u32 %v801, 16
        %v932 = vrot.slane %v930, 5
        %v933 = vsel %vm813, %v928, %v932
        %v935 = vshrl.u32 %v802, 16
        %v937 = vrot.slane %v935, 4
        %v938 = vshll.u32 %v802, 16
        %v940 = vrot.slane %v938, 5
        %v941 = vor.u32 %v937, %v940
        %v942 = vrot.slane %v941, 4
        %v944 = vshll.u32 %v803, 16
        %v946 = vrot.slane %v944, 5
        %v947 = vsel %vm813, %v942, %v946
        %v948 = vshrl.u32 %v803, 16
        %v950 = vrot.slane %v948, 4
        %v951 = vor.u32 %v950, %v946
        %v952 = vrot.slane %v951, 4
        %v954 = vshll.u32 %v804, 16
        %v956 = vrot.slane %v954, 5
        %v957 = vsel %vm813, %v952, %v956
        %v959 = vshrl.u32 %v805, 16
        %v961 = vrot.slane %v959, 4
        %v962 = vshll.u32 %v805, 16
        %v964 = vrot.slane %v962, 5
        %v965 = vor.u32 %v961, %v964
        %v966 = vrot.slane %v965, 4
        %v968 = vshll.u32 %v806, 16
        %v970 = vrot.slane %v968, 5
        %v971 = vsel %vm813, %v966, %v970
        %v972 = vshrl.u32 %v806, 16
        %v974 = vrot.slane %v972, 4
        %v975 = vor.u32 %v974, %v970
        %v976 = vrot.slane %v975, 4
        %v978 = vshll.u32 %v807, 16
        %v980 = vrot.slane %v978, 5
        %v981 = vsel %vm813, %v976, %v980
        %v983 = vshrl.u32 %v808, 16
        %v985 = vrot.slane %v983, 4
        %v986 = vshll.u32 %v808, 16
        %v988 = vrot.slane %v986, 5
        %v989 = vor.u32 %v985, %v988
        %v990 = vrot.slane %v989, 4
        %v992 = vshll.u32 %v809, 16
        %v994 = vrot.slane %v992, 5
        %v995 = vsel %vm813, %v990, %v994
        %v996 = vshrl.u32 %v809, 16
        %v998 = vrot.slane %v996, 4
        %v999 = vor.u32 %v998, %v994
        %v1000 = vrot.slane %v999, 4
        %v1002 = vshll.u32 %v810, 16
        %v1004 = vrot.slane %v1002, 5
        %v1005 = vsel %vm813, %v1000, %v1004
        %1006 = vrot.lane.b32.xlu0 %v827, 8
        %v1007 = vpop.permute.xlu0 %1006
        %1008 = vrot.lane.b32.xlu0 %v837, 8
        %v1009 = vpop.permute.xlu0 %1008
        %1010 = vrot.lane.b32.xlu0 %v851, 8
        %v1011 = vpop.permute.xlu0 %1010
        %1012 = vrot.lane.b32.xlu0 %v861, 8
        %v1013 = vpop.permute.xlu0 %1012
        %1014 = vrot.lane.b32.xlu0 %v875, 8
        %v1015 = vpop.permute.xlu0 %1014
        %1016 = vrot.lane.b32.xlu0 %v885, 8
        %v1017 = vpop.permute.xlu0 %1016
        %1018 = vrot.lane.b32.xlu0 %v899, 8
        %v1019 = vpop.permute.xlu0 %1018
        %1020 = vrot.lane.b32.xlu0 %v909, 8
        %v1021 = vpop.permute.xlu0 %1020
        %1022 = vrot.lane.b32.xlu0 %v923, 8
        %v1023 = vpop.permute.xlu0 %1022
        %1024 = vrot.lane.b32.xlu0 %v933, 8
        %v1025 = vpop.permute.xlu0 %1024
        %1026 = vrot.lane.b32.xlu0 %v947, 8
        %v1027 = vpop.permute.xlu0 %1026
        %1028 = vrot.lane.b32.xlu0 %v957, 8
        %v1029 = vpop.permute.xlu0 %1028
        %1030 = vrot.lane.b32.xlu0 %v971, 8
        %v1031 = vpop.permute.xlu0 %1030
        %1032 = vrot.lane.b32.xlu0 %v981, 8
        %v1033 = vpop.permute.xlu0 %1032
        %1034 = vrot.lane.b32.xlu0 %v995, 8
        %v1035 = vpop.permute.xlu0 %1034
        %1036 = vrot.lane.b32.xlu0 %v1005, 8
        %v1037 = vpop.permute.xlu0 %1036
        %vm1054 = vcmask 126016
        %1055 = vst.msk [vmem:[#allocation3] sm:$0xf] %vm1054, %v1007
        %1056 = vst.msk [vmem:[#allocation3 + $0x4] sm:$0xf] %vm1054, %v1009
        %1057 = vst.msk [vmem:[#allocation3 + $0x8] sm:$0xf] %vm1054, %v1011
        %1058 = vst.msk [vmem:[#allocation3 + $0xc] sm:$0xf] %vm1054, %v1013
        %1059 = vst.msk [vmem:[#allocation3 + $0x10] sm:$0xf] %vm1054, %v1015
        %1060 = vst.msk [vmem:[#allocation3 + $0x14] sm:$0xf] %vm1054, %v1017
        %1061 = vst.msk [vmem:[#allocation3 + $0x18] sm:$0xf] %vm1054, %v1019
        %1062 = vst.msk [vmem:[#allocation3 + $0x1c] sm:$0xf] %vm1054, %v1021
        %1063 = vst.msk [vmem:[#allocation3 + $0x20] sm:$0xf] %vm1054, %v1023
        %1064 = vst.msk [vmem:[#allocation3 + $0x24] sm:$0xf] %vm1054, %v1025
        %1065 = vst.msk [vmem:[#allocation3 + $0x28] sm:$0xf] %vm1054, %v1027
        %1066 = vst.msk [vmem:[#allocation3 + $0x2c] sm:$0xf] %vm1054, %v1029
        %1067 = vst.msk [vmem:[#allocation3 + $0x30] sm:$0xf] %vm1054, %v1031
        %1068 = vst.msk [vmem:[#allocation3 + $0x34] sm:$0xf] %vm1054, %v1033
        %1069 = vst.msk [vmem:[#allocation3 + $0x38] sm:$0xf] %vm1054, %v1035
        %1070 = vst.msk [vmem:[#allocation3 + $0x3c] sm:$0xf] %vm1054, %v1037
        %v1071 = vld [vmem:[#allocation2] sm:$0xe]
        %v1072 = vld [vmem:[#allocation2 + $0x4] sm:$0xf]
        %v1073 = vld [vmem:[#allocation2 + $0x8] sm:$0x1]
        %v1074 = vld [vmem:[#allocation2 + $0xc] sm:$0xe]
        %v1075 = vld [vmem:[#allocation2 + $0x10] sm:$0xf]
        %v1076 = vld [vmem:[#allocation2 + $0x14] sm:$0x1]
        %v1077 = vld [vmem:[#allocation2 + $0x18] sm:$0xe]
        %v1078 = vld [vmem:[#allocation2 + $0x1c] sm:$0xf]
        %v1079 = vld [vmem:[#allocation2 + $0x20] sm:$0x1]
        %v1080 = vld [vmem:[#allocation2 + $0x24] sm:$0xe]
        %v1081 = vld [vmem:[#allocation2 + $0x28] sm:$0xf]
        %v1082 = vld [vmem:[#allocation2 + $0x2c] sm:$0x1]
        %v1083 = vld [vmem:[#allocation2 + $0x30] sm:$0xe]
        %v1084 = vld [vmem:[#allocation2 + $0x34] sm:$0xf]
        %v1085 = vld [vmem:[#allocation2 + $0x38] sm:$0x1]
        %v1086 = vld [vmem:[#allocation2 + $0x3c] sm:$0xe]
        %v1087 = vld [vmem:[#allocation2 + $0x40] sm:$0xf]
        %v1088 = vld [vmem:[#allocation2 + $0x44] sm:$0x1]
        %v1089 = vld [vmem:[#allocation2 + $0x48] sm:$0xe]
        %v1090 = vld [vmem:[#allocation2 + $0x4c] sm:$0xf]
        %v1091 = vld [vmem:[#allocation2 + $0x50] sm:$0x1]
        %v1092 = vld [vmem:[#allocation2 + $0x54] sm:$0xe]
        %v1093 = vld [vmem:[#allocation2 + $0x58] sm:$0xf]
        %v1094 = vld [vmem:[#allocation2 + $0x5c] sm:$0x1]
        %vm1119 = vcmask 1042432
        %vm1120 = vcmask 1046532
        %vm1121 = vmor %vm1119, %vm1120
        %v1122 = vrot.slane %v1071, 5
        %v1123 = vrot.slane %v1122, 4
        %v1124 = vrot.slane %v1072, 5
        %v1125 = vsel %vm1121, %v1123, %v1124
        %v1126 = vrot.slane %v1124, 4
        %v1127 = vrot.slane %v1073, 5
        %v1128 = vsel %vm1121, %v1126, %v1127
        %v1129 = vrot.slane %v1074, 5
        %v1130 = vrot.slane %v1129, 4
        %v1131 = vrot.slane %v1075, 5
        %v1132 = vsel %vm1121, %v1130, %v1131
        %v1133 = vrot.slane %v1131, 4
        %v1134 = vrot.slane %v1076, 5
        %v1135 = vsel %vm1121, %v1133, %v1134
        %v1136 = vrot.slane %v1077, 5
        %v1137 = vrot.slane %v1136, 4
        %v1138 = vrot.slane %v1078, 5
        %v1139 = vsel %vm1121, %v1137, %v1138
        %v1140 = vrot.slane %v1138, 4
        %v1141 = vrot.slane %v1079, 5
        %v1142 = vsel %vm1121, %v1140, %v1141
        %v1143 = vrot.slane %v1080, 5
        %v1144 = vrot.slane %v1143, 4
        %v1145 = vrot.slane %v1081, 5
        %v1146 = vsel %vm1121, %v1144, %v1145
        %v1147 = vrot.slane %v1145, 4
        %v1148 = vrot.slane %v1082, 5
        %v1149 = vsel %vm1121, %v1147, %v1148
        %v1150 = vrot.slane %v1083, 5
        %v1151 = vrot.slane %v1150, 4
        %v1152 = vrot.slane %v1084, 5
        %v1153 = vsel %vm1121, %v1151, %v1152
        %v1154 = vrot.slane %v1152, 4
        %v1155 = vrot.slane %v1085, 5
        %v1156 = vsel %vm1121, %v1154, %v1155
        %v1157 = vrot.slane %v1086, 5
        %v1158 = vrot.slane %v1157, 4
        %v1159 = vrot.slane %v1087, 5
        %v1160 = vsel %vm1121, %v1158, %v1159
        %v1161 = vrot.slane %v1159, 4
        %v1162 = vrot.slane %v1088, 5
        %v1163 = vsel %vm1121, %v1161, %v1162
        %v1164 = vrot.slane %v1089, 5
        %v1165 = vrot.slane %v1164, 4
        %v1166 = vrot.slane %v1090, 5
        %v1167 = vsel %vm1121, %v1165, %v1166
        %v1168 = vrot.slane %v1166, 4
        %v1169 = vrot.slane %v1091, 5
        %v1170 = vsel %vm1121, %v1168, %v1169
        %v1171 = vrot.slane %v1092, 5
        %v1172 = vrot.slane %v1171, 4
        %v1173 = vrot.slane %v1093, 5
        %v1174 = vsel %vm1121, %v1172, %v1173
        %v1175 = vrot.slane %v1173, 4
        %v1176 = vrot.slane %v1094, 5
        %v1177 = vsel %vm1121, %v1175, %v1176
        %1178 = vrot.lane.b32.xlu0 %v1125, 16
        %v1179 = vpop.permute.xlu0 %1178
        %1180 = vrot.lane.b32.xlu0 %v1128, 16
        %v1181 = vpop.permute.xlu0 %1180
        %1182 = vrot.lane.b32.xlu0 %v1132, 16
        %v1183 = vpop.permute.xlu0 %1182
        %1184 = vrot.lane.b32.xlu0 %v1135, 16
        %v1185 = vpop.permute.xlu0 %1184
        %1186 = vrot.lane.b32.xlu0 %v1139, 16
        %v1187 = vpop.permute.xlu0 %1186
        %1188 = vrot.lane.b32.xlu0 %v1142, 16
        %v1189 = vpop.permute.xlu0 %1188
        %1190 = vrot.lane.b32.xlu0 %v1146, 16
        %v1191 = vpop.permute.xlu0 %1190
        %1192 = vrot.lane.b32.xlu0 %v1149, 16
        %v1193 = vpop.permute.xlu0 %1192
        %1194 = vrot.lane.b32.xlu0 %v1153, 16
        %v1195 = vpop.permute.xlu0 %1194
        %1196 = vrot.lane.b32.xlu0 %v1156, 16
        %v1197 = vpop.permute.xlu0 %1196
        %1198 = vrot.lane.b32.xlu0 %v1160, 16
        %v1199 = vpop.permute.xlu0 %1198
        %1200 = vrot.lane.b32.xlu0 %v1163, 16
        %v1201 = vpop.permute.xlu0 %1200
        %1202 = vrot.lane.b32.xlu0 %v1167, 16
        %v1203 = vpop.permute.xlu0 %1202
        %1204 = vrot.lane.b32.xlu0 %v1170, 16
        %v1205 = vpop.permute.xlu0 %1204
        %1206 = vrot.lane.b32.xlu0 %v1174, 16
        %v1207 = vpop.permute.xlu0 %1206
        %1208 = vrot.lane.b32.xlu0 %v1177, 16
        %v1209 = vpop.permute.xlu0 %1208
        %vm1226 = vcmask 191616
        %1227 = vst.msk [vmem:[#allocation3] sm:$0xf] %vm1226, %v1179
        %1228 = vst.msk [vmem:[#allocation3 + $0x4] sm:$0xf] %vm1226, %v1181
        %1229 = vst.msk [vmem:[#allocation3 + $0x8] sm:$0xf] %vm1226, %v1183
        %1230 = vst.msk [vmem:[#allocation3 + $0xc] sm:$0xf] %vm1226, %v1185
        %1231 = vst.msk [vmem:[#allocation3 + $0x10] sm:$0xf] %vm1226, %v1187
        %1232 = vst.msk [vmem:[#allocation3 + $0x14] sm:$0xf] %vm1226, %v1189
        %1233 = vst.msk [vmem:[#allocation3 + $0x18] sm:$0xf] %vm1226, %v1191
        %1234 = vst.msk [vmem:[#allocation3 + $0x1c] sm:$0xf] %vm1226, %v1193
        %1235 = vst.msk [vmem:[#allocation3 + $0x20] sm:$0xf] %vm1226, %v1195
        %1236 = vst.msk [vmem:[#allocation3 + $0x24] sm:$0xf] %vm1226, %v1197
        %1237 = vst.msk [vmem:[#allocation3 + $0x28] sm:$0xf] %vm1226, %v1199
        %1238 = vst.msk [vmem:[#allocation3 + $0x2c] sm:$0xf] %vm1226, %v1201
        %1239 = vst.msk [vmem:[#allocation3 + $0x30] sm:$0xf] %vm1226, %v1203
        %1240 = vst.msk [vmem:[#allocation3 + $0x34] sm:$0xf] %vm1226, %v1205
        %1241 = vst.msk [vmem:[#allocation3 + $0x38] sm:$0xf] %vm1226, %v1207
        %1242 = vst.msk [vmem:[#allocation3 + $0x3c] sm:$0xf] %vm1226, %v1209
        %v1243 = vld [vmem:[%s698] sm:$0xf]
        %v1244 = vld [vmem:[%s698 + $0x4] sm:$0xf]
        %v1245 = vld [vmem:[%s698 + $0xc] sm:$0xf]
        %v1246 = vld [vmem:[%s698 + $0x10] sm:$0xf]
        %v1247 = vld [vmem:[%s698 + $0x18] sm:$0xf]
        %v1248 = vld [vmem:[%s698 + $0x1c] sm:$0xf]
        %v1249 = vld [vmem:[%s698 + $0x24] sm:$0xf]
        %v1250 = vld [vmem:[%s698 + $0x28] sm:$0xf]
        %v1251 = vld [vmem:[%s698 + $0x30] sm:$0xf]
        %v1252 = vld [vmem:[%s698 + $0x34] sm:$0xf]
        %v1253 = vld [vmem:[%s698 + $0x3c] sm:$0xf]
        %v1254 = vld [vmem:[%s698 + $0x40] sm:$0xf]
        %v1255 = vld [vmem:[%s698 + $0x48] sm:$0xf]
        %v1256 = vld [vmem:[%s698 + $0x4c] sm:$0xf]
        %v1257 = vld [vmem:[%s698 + $0x54] sm:$0xf]
        %v1258 = vld [vmem:[%s698 + $0x58] sm:$0xf]
        %1275 = vrot.lane.b32.xlu0 %v1243, 24
        %v1276 = vpop.permute.xlu0 %1275
        %1277 = vrot.lane.b32.xlu0 %v1244, 24
        %v1278 = vpop.permute.xlu0 %1277
        %1279 = vrot.lane.b32.xlu0 %v1245, 24
        %v1280 = vpop.permute.xlu0 %1279
        %1281 = vrot.lane.b32.xlu0 %v1246, 24
        %v1282 = vpop.permute.xlu0 %1281
        %1283 = vrot.lane.b32.xlu0 %v1247, 24
        %v1284 = vpop.permute.xlu0 %1283
        %1285 = vrot.lane.b32.xlu0 %v1248, 24
        %v1286 = vpop.permute.xlu0 %1285
        %1287 = vrot.lane.b32.xlu0 %v1249, 24
        %v1288 = vpop.permute.xlu0 %1287
        %1289 = vrot.lane.b32.xlu0 %v1250, 24
        %v1290 = vpop.permute.xlu0 %1289
        %1291 = vrot.lane.b32.xlu0 %v1251, 24
        %v1292 = vpop.permute.xlu0 %1291
        %1293 = vrot.lane.b32.xlu0 %v1252, 24
        %v1294 = vpop.permute.xlu0 %1293
        %1295 = vrot.lane.b32.xlu0 %v1253, 24
        %v1296 = vpop.permute.xlu0 %1295
        %1297 = vrot.lane.b32.xlu0 %v1254, 24
        %v1298 = vpop.permute.xlu0 %1297
        %1299 = vrot.lane.b32.xlu0 %v1255, 24
        %v1300 = vpop.permute.xlu0 %1299
        %1301 = vrot.lane.b32.xlu0 %v1256, 24
        %v1302 = vpop.permute.xlu0 %1301
        %1303 = vrot.lane.b32.xlu0 %v1257, 24
        %v1304 = vpop.permute.xlu0 %1303
        %1305 = vrot.lane.b32.xlu0 %v1258, 24
        %v1306 = vpop.permute.xlu0 %1305
        %vm1323 = vcmask 257216
        %1324 = vst.msk [vmem:[#allocation3] sm:$0xf] %vm1323, %v1276
        %1325 = vst.msk [vmem:[#allocation3 + $0x4] sm:$0xf] %vm1323, %v1278
        %1326 = vst.msk [vmem:[#allocation3 + $0x8] sm:$0xf] %vm1323, %v1280
        %1327 = vst.msk [vmem:[#allocation3 + $0xc] sm:$0xf] %vm1323, %v1282
        %1328 = vst.msk [vmem:[#allocation3 + $0x10] sm:$0xf] %vm1323, %v1284
        %1329 = vst.msk [vmem:[#allocation3 + $0x14] sm:$0xf] %vm1323, %v1286
        %1330 = vst.msk [vmem:[#allocation3 + $0x18] sm:$0xf] %vm1323, %v1288
        %1331 = vst.msk [vmem:[#allocation3 + $0x1c] sm:$0xf] %vm1323, %v1290
        %1332 = vst.msk [vmem:[#allocation3 + $0x20] sm:$0xf] %vm1323, %v1292
        %1333 = vst.msk [vmem:[#allocation3 + $0x24] sm:$0xf] %vm1323, %v1294
        %1334 = vst.msk [vmem:[#allocation3 + $0x28] sm:$0xf] %vm1323, %v1296
        %1335 = vst.msk [vmem:[#allocation3 + $0x2c] sm:$0xf] %vm1323, %v1298
        %1336 = vst.msk [vmem:[#allocation3 + $0x30] sm:$0xf] %vm1323, %v1300
        %1337 = vst.msk [vmem:[#allocation3 + $0x34] sm:$0xf] %vm1323, %v1302
        %1338 = vst.msk [vmem:[#allocation3 + $0x38] sm:$0xf] %vm1323, %v1304
        %1339 = vst.msk [vmem:[#allocation3 + $0x3c] sm:$0xf] %vm1323, %v1306
        %v1340 = vld [vmem:[%s698] sm:$0xf]
        %v1341 = vld [vmem:[%s698 + $0x4] sm:$0xf]
        %v1342 = vld [vmem:[%s698 + $0x8] sm:$0x1]
        %v1343 = vld [vmem:[%s698 + $0xc] sm:$0xf]
        %v1344 = vld [vmem:[%s698 + $0x10] sm:$0xf]
        %v1345 = vld [vmem:[%s698 + $0x14] sm:$0x1]
        %v1346 = vld [vmem:[%s698 + $0x18] sm:$0xf]
        %v1347 = vld [vmem:[%s698 + $0x1c] sm:$0xf]
        %v1348 = vld [vmem:[%s698 + $0x20] sm:$0x1]
        %v1349 = vld [vmem:[%s698 + $0x24] sm:$0xf]
        %v1350 = vld [vmem:[%s698 + $0x28] sm:$0xf]
        %v1351 = vld [vmem:[%s698 + $0x2c] sm:$0x1]
        %v1352 = vld [vmem:[%s698 + $0x30] sm:$0xf]
        %v1353 = vld [vmem:[%s698 + $0x34] sm:$0xf]
        %v1354 = vld [vmem:[%s698 + $0x38] sm:$0x1]
        %v1355 = vld [vmem:[%s698 + $0x3c] sm:$0xf]
        %v1356 = vld [vmem:[%s698 + $0x40] sm:$0xf]
        %v1357 = vld [vmem:[%s698 + $0x44] sm:$0x1]
        %v1358 = vld [vmem:[%s698 + $0x48] sm:$0xf]
        %v1359 = vld [vmem:[%s698 + $0x4c] sm:$0xf]
        %v1360 = vld [vmem:[%s698 + $0x50] sm:$0x1]
        %v1361 = vld [vmem:[%s698 + $0x54] sm:$0xf]
        %v1362 = vld [vmem:[%s698 + $0x58] sm:$0xf]
        %v1363 = vld [vmem:[%s698 + $0x5c] sm:$0x1]
        %v1365 = vshrl.u32 %v1340, 16
        %v1367 = vrot.slane %v1365, 4
        %v1368 = vshll.u32 %v1340, 16
        %v1370 = vrot.slane %v1368, 5
        %v1371 = vor.u32 %v1367, %v1370
        %v1372 = vrot.slane %v1371, 4
        %v1374 = vshll.u32 %v1341, 16
        %v1376 = vrot.slane %v1374, 5
        %v1377 = vsel %vm813, %v1372, %v1376
        %v1378 = vshrl.u32 %v1341, 16
        %v1380 = vrot.slane %v1378, 4
        %v1381 = vor.u32 %v1380, %v1376
        %v1382 = vrot.slane %v1381, 4
        %v1384 = vshll.u32 %v1342, 16
        %v1386 = vrot.slane %v1384, 5
        %v1387 = vsel %vm813, %v1382, %v1386
        %v1389 = vshrl.u32 %v1343, 16
        %v1391 = vrot.slane %v1389, 4
        %v1392 = vshll.u32 %v1343, 16
        %v1394 = vrot.slane %v1392, 5
        %v1395 = vor.u32 %v1391, %v1394
        %v1396 = vrot.slane %v1395, 4
        %v1398 = vshll.u32 %v1344, 16
        %v1400 = vrot.slane %v1398, 5
        %v1401 = vsel %vm813, %v1396, %v1400
        %v1402 = vshrl.u32 %v1344, 16
        %v1404 = vrot.slane %v1402, 4
        %v1405 = vor.u32 %v1404, %v1400
        %v1406 = vrot.slane %v1405, 4
        %v1408 = vshll.u32 %v1345, 16
        %v1410 = vrot.slane %v1408, 5
        %v1411 = vsel %vm813, %v1406, %v1410
        %v1413 = vshrl.u32 %v1346, 16
        %v1415 = vrot.slane %v1413, 4
        %v1416 = vshll.u32 %v1346, 16
        %v1418 = vrot.slane %v1416, 5
        %v1419 = vor.u32 %v1415, %v1418
        %v1420 = vrot.slane %v1419, 4
        %v1422 = vshll.u32 %v1347, 16
        %v1424 = vrot.slane %v1422, 5
        %v1425 = vsel %vm813, %v1420, %v1424
        %v1426 = vshrl.u32 %v1347, 16
        %v1428 = vrot.slane %v1426, 4
        %v1429 = vor.u32 %v1428, %v1424
        %v1430 = vrot.slane %v1429, 4
        %v1432 = vshll.u32 %v1348, 16
        %v1434 = vrot.slane %v1432, 5
        %v1435 = vsel %vm813, %v1430, %v1434
        %v1437 = vshrl.u32 %v1349, 16
        %v1439 = vrot.slane %v1437, 4
        %v1440 = vshll.u32 %v1349, 16
        %v1442 = vrot.slane %v1440, 5
        %v1443 = vor.u32 %v1439, %v1442
        %v1444 = vrot.slane %v1443, 4
        %v1446 = vshll.u32 %v1350, 16
        %v1448 = vrot.slane %v1446, 5
        %v1449 = vsel %vm813, %v1444, %v1448
        %v1450 = vshrl.u32 %v1350, 16
        %v1452 = vrot.slane %v1450, 4
        %v1453 = vor.u32 %v1452, %v1448
        %v1454 = vrot.slane %v1453, 4
        %v1456 = vshll.u32 %v1351, 16
        %v1458 = vrot.slane %v1456, 5
        %v1459 = vsel %vm813, %v1454, %v1458
        %v1461 = vshrl.u32 %v1352, 16
        %v1463 = vrot.slane %v1461, 4
        %v1464 = vshll.u32 %v1352, 16
        %v1466 = vrot.slane %v1464, 5
        %v1467 = vor.u32 %v1463, %v1466
        %v1468 = vrot.slane %v1467, 4
        %v1470 = vshll.u32 %v1353, 16
        %v1472 = vrot.slane %v1470, 5
        %v1473 = vsel %vm813, %v1468, %v1472
        %v1474 = vshrl.u32 %v1353, 16
        %v1476 = vrot.slane %v1474, 4
        %v1477 = vor.u32 %v1476, %v1472
        %v1478 = vrot.slane %v1477, 4
        %v1480 = vshll.u32 %v1354, 16
        %v1482 = vrot.slane %v1480, 5
        %v1483 = vsel %vm813, %v1478, %v1482
        %v1485 = vshrl.u32 %v1355, 16
        %v1487 = vrot.slane %v1485, 4
        %v1488 = vshll.u32 %v1355, 16
        %v1490 = vrot.slane %v1488, 5
        %v1491 = vor.u32 %v1487, %v1490
        %v1492 = vrot.slane %v1491, 4
        %v1494 = vshll.u32 %v1356, 16
        %v1496 = vrot.slane %v1494, 5
        %v1497 = vsel %vm813, %v1492, %v1496
        %v1498 = vshrl.u32 %v1356, 16
        %v1500 = vrot.slane %v1498, 4
        %v1501 = vor.u32 %v1500, %v1496
        %v1502 = vrot.slane %v1501, 4
        %v1504 = vshll.u32 %v1357, 16
        %v1506 = vrot.slane %v1504, 5
        %v1507 = vsel %vm813, %v1502, %v1506
        %v1509 = vshrl.u32 %v1358, 16
        %v1511 = vrot.slane %v1509, 4
        %v1512 = vshll.u32 %v1358, 16
        %v1514 = vrot.slane %v1512, 5
        %v1515 = vor.u32 %v1511, %v1514
        %v1516 = vrot.slane %v1515, 4
        %v1518 = vshll.u32 %v1359, 16
        %v1520 = vrot.slane %v1518, 5
        %v1521 = vsel %vm813, %v1516, %v1520
        %v1522 = vshrl.u32 %v1359, 16
        %v1524 = vrot.slane %v1522, 4
        %v1525 = vor.u32 %v1524, %v1520
        %v1526 = vrot.slane %v1525, 4
        %v1528 = vshll.u32 %v1360, 16
        %v1530 = vrot.slane %v1528, 5
        %v1531 = vsel %vm813, %v1526, %v1530
        %v1533 = vshrl.u32 %v1361, 16
        %v1535 = vrot.slane %v1533, 4
        %v1536 = vshll.u32 %v1361, 16
        %v1538 = vrot.slane %v1536, 5
        %v1539 = vor.u32 %v1535, %v1538
        %v1540 = vrot.slane %v1539, 4
        %v1542 = vshll.u32 %v1362, 16
        %v1544 = vrot.slane %v1542, 5
        %v1545 = vsel %vm813, %v1540, %v1544
        %v1546 = vshrl.u32 %v1362, 16
        %v1548 = vrot.slane %v1546, 4
        %v1549 = vor.u32 %v1548, %v1544
        %v1550 = vrot.slane %v1549, 4
        %v1552 = vshll.u32 %v1363, 16
        %v1554 = vrot.slane %v1552, 5
        %v1555 = vsel %vm813, %v1550, %v1554
        %1556 = vrot.lane.b32.xlu0 %v1377, 32
        %v1557 = vpop.permute.xlu0 %1556
        %1558 = vrot.lane.b32.xlu0 %v1387, 32
        %v1559 = vpop.permute.xlu0 %1558
        %1560 = vrot.lane.b32.xlu0 %v1401, 32
        %v1561 = vpop.permute.xlu0 %1560
        %1562 = vrot.lane.b32.xlu0 %v1411, 32
        %v1563 = vpop.permute.xlu0 %1562
        %1564 = vrot.lane.b32.xlu0 %v1425, 32
        %v1565 = vpop.permute.xlu0 %1564
        %1566 = vrot.lane.b32.xlu0 %v1435, 32
        %v1567 = vpop.permute.xlu0 %1566
        %1568 = vrot.lane.b32.xlu0 %v1449, 32
        %v1569 = vpop.permute.xlu0 %1568
        %1570 = vrot.lane.b32.xlu0 %v1459, 32
        %v1571 = vpop.permute.xlu0 %1570
        %1572 = vrot.lane.b32.xlu0 %v1473, 32
        %v1573 = vpop.permute.xlu0 %1572
        %1574 = vrot.lane.b32.xlu0 %v1483, 32
        %v1575 = vpop.permute.xlu0 %1574
        %1576 = vrot.lane.b32.xlu0 %v1497, 32
        %v1577 = vpop.permute.xlu0 %1576
        %1578 = vrot.lane.b32.xlu0 %v1507, 32
        %v1579 = vpop.permute.xlu0 %1578
        %1580 = vrot.lane.b32.xlu0 %v1521, 32
        %v1581 = vpop.permute.xlu0 %1580
        %1582 = vrot.lane.b32.xlu0 %v1531, 32
        %v1583 = vpop.permute.xlu0 %1582
        %1584 = vrot.lane.b32.xlu0 %v1545, 32
        %v1585 = vpop.permute.xlu0 %1584
        %1586 = vrot.lane.b32.xlu0 %v1555, 32
        %v1587 = vpop.permute.xlu0 %1586
        %vm1604 = vcmask 322816
        %1605 = vst.msk [vmem:[#allocation3] sm:$0xf] %vm1604, %v1557
        %1606 = vst.msk [vmem:[#allocation3 + $0x4] sm:$0xf] %vm1604, %v1559
        %1607 = vst.msk [vmem:[#allocation3 + $0x8] sm:$0xf] %vm1604, %v1561
        %1608 = vst.msk [vmem:[#allocation3 + $0xc] sm:$0xf] %vm1604, %v1563
        %1609 = vst.msk [vmem:[#allocation3 + $0x10] sm:$0xf] %vm1604, %v1565
        %1610 = vst.msk [vmem:[#allocation3 + $0x14] sm:$0xf] %vm1604, %v1567
        %1611 = vst.msk [vmem:[#allocation3 + $0x18] sm:$0xf] %vm1604, %v1569
        %1612 = vst.msk [vmem:[#allocation3 + $0x1c] sm:$0xf] %vm1604, %v1571
        %1613 = vst.msk [vmem:[#allocation3 + $0x20] sm:$0xf] %vm1604, %v1573
        %1614 = vst.msk [vmem:[#allocation3 + $0x24] sm:$0xf] %vm1604, %v1575
        %1615 = vst.msk [vmem:[#allocation3 + $0x28] sm:$0xf] %vm1604, %v1577
        %1616 = vst.msk [vmem:[#allocation3 + $0x2c] sm:$0xf] %vm1604, %v1579
        %1617 = vst.msk [vmem:[#allocation3 + $0x30] sm:$0xf] %vm1604, %v1581
        %1618 = vst.msk [vmem:[#allocation3 + $0x34] sm:$0xf] %vm1604, %v1583
        %1619 = vst.msk [vmem:[#allocation3 + $0x38] sm:$0xf] %vm1604, %v1585
        %1620 = vst.msk [vmem:[#allocation3 + $0x3c] sm:$0xf] %vm1604, %v1587
        %v1621 = vld [vmem:[%s698] sm:$0xe]
        %v1622 = vld [vmem:[%s698 + $0x4] sm:$0xf]
        %v1623 = vld [vmem:[%s698 + $0x8] sm:$0x1]
        %v1624 = vld [vmem:[%s698 + $0xc] sm:$0xe]
        %v1625 = vld [vmem:[%s698 + $0x10] sm:$0xf]
        %v1626 = vld [vmem:[%s698 + $0x14] sm:$0x1]
        %v1627 = vld [vmem:[%s698 + $0x18] sm:$0xe]
        %v1628 = vld [vmem:[%s698 + $0x1c] sm:$0xf]
        %v1629 = vld [vmem:[%s698 + $0x20] sm:$0x1]
        %v1630 = vld [vmem:[%s698 + $0x24] sm:$0xe]
        %v1631 = vld [vmem:[%s698 + $0x28] sm:$0xf]
        %v1632 = vld [vmem:[%s698 + $0x2c] sm:$0x1]
        %v1633 = vld [vmem:[%s698 + $0x30] sm:$0xe]
        %v1634 = vld [vmem:[%s698 + $0x34] sm:$0xf]
        %v1635 = vld [vmem:[%s698 + $0x38] sm:$0x1]
        %v1636 = vld [vmem:[%s698 + $0x3c] sm:$0xe]
        %v1637 = vld [vmem:[%s698 + $0x40] sm:$0xf]
        %v1638 = vld [vmem:[%s698 + $0x44] sm:$0x1]
        %v1639 = vld [vmem:[%s698 + $0x48] sm:$0xe]
        %v1640 = vld [vmem:[%s698 + $0x4c] sm:$0xf]
        %v1641 = vld [vmem:[%s698 + $0x50] sm:$0x1]
        %v1642 = vld [vmem:[%s698 + $0x54] sm:$0xe]
        %v1643 = vld [vmem:[%s698 + $0x58] sm:$0xf]
        %v1644 = vld [vmem:[%s698 + $0x5c] sm:$0x1]
        %v1669 = vrot.slane %v1621, 5
        %v1670 = vrot.slane %v1669, 4
        %v1671 = vrot.slane %v1622, 5
        %v1672 = vsel %vm1121, %v1670, %v1671
        %v1673 = vrot.slane %v1671, 4
        %v1674 = vrot.slane %v1623, 5
        %v1675 = vsel %vm1121, %v1673, %v1674
        %v1676 = vrot.slane %v1624, 5
        %v1677 = vrot.slane %v1676, 4
        %v1678 = vrot.slane %v1625, 5
        %v1679 = vsel %vm1121, %v1677, %v1678
        %v1680 = vrot.slane %v1678, 4
        %v1681 = vrot.slane %v1626, 5
        %v1682 = vsel %vm1121, %v1680, %v1681
        %v1683 = vrot.slane %v1627, 5
        %v1684 = vrot.slane %v1683, 4
        %v1685 = vrot.slane %v1628, 5
        %v1686 = vsel %vm1121, %v1684, %v1685
        %v1687 = vrot.slane %v1685, 4
        %v1688 = vrot.slane %v1629, 5
        %v1689 = vsel %vm1121, %v1687, %v1688
        %v1690 = vrot.slane %v1630, 5
        %v1691 = vrot.slane %v1690, 4
        %v1692 = vrot.slane %v1631, 5
        %v1693 = vsel %vm1121, %v1691, %v1692
        %v1694 = vrot.slane %v1692, 4
        %v1695 = vrot.slane %v1632, 5
        %v1696 = vsel %vm1121, %v1694, %v1695
        %v1697 = vrot.slane %v1633, 5
        %v1698 = vrot.slane %v1697, 4
        %v1699 = vrot.slane %v1634, 5
        %v1700 = vsel %vm1121, %v1698, %v1699
        %v1701 = vrot.slane %v1699, 4
        %v1702 = vrot.slane %v1635, 5
        %v1703 = vsel %vm1121, %v1701, %v1702
        %v1704 = vrot.slane %v1636, 5
        %v1705 = vrot.slane %v1704, 4
        %v1706 = vrot.slane %v1637, 5
        %v1707 = vsel %vm1121, %v1705, %v1706
        %v1708 = vrot.slane %v1706, 4
        %v1709 = vrot.slane %v1638, 5
        %v1710 = vsel %vm1121, %v1708, %v1709
        %v1711 = vrot.slane %v1639, 5
        %v1712 = vrot.slane %v1711, 4
        %v1713 = vrot.slane %v1640, 5
        %v1714 = vsel %vm1121, %v1712, %v1713
        %v1715 = vrot.slane %v1713, 4
        %v1716 = vrot.slane %v1641, 5
        %v1717 = vsel %vm1121, %v1715, %v1716
        %v1718 = vrot.slane %v1642, 5
        %v1719 = vrot.slane %v1718, 4
        %v1720 = vrot.slane %v1643, 5
        %v1721 = vsel %vm1121, %v1719, %v1720
        %v1722 = vrot.slane %v1720, 4
        %v1723 = vrot.slane %v1644, 5
        %v1724 = vsel %vm1121, %v1722, %v1723
        %1725 = vrot.lane.b32.xlu0 %v1672, 40
        %v1726 = vpop.permute.xlu0 %1725
        %1727 = vrot.lane.b32.xlu0 %v1675, 40
        %v1728 = vpop.permute.xlu0 %1727
        %1729 = vrot.lane.b32.xlu0 %v1679, 40
        %v1730 = vpop.permute.xlu0 %1729
        %1731 = vrot.lane.b32.xlu0 %v1682, 40
        %v1732 = vpop.permute.xlu0 %1731
        %1733 = vrot.lane.b32.xlu0 %v1686, 40
        %v1734 = vpop.permute.xlu0 %1733
        %1735 = vrot.lane.b32.xlu0 %v1689, 40
        %v1736 = vpop.permute.xlu0 %1735
        %1737 = vrot.lane.b32.xlu0 %v1693, 40
        %v1738 = vpop.permute.xlu0 %1737
        %1739 = vrot.lane.b32.xlu0 %v1696, 40
        %v1740 = vpop.permute.xlu0 %1739
        %1741 = vrot.lane.b32.xlu0 %v1700, 40
        %v1742 = vpop.permute.xlu0 %1741
        %1743 = vrot.lane.b32.xlu0 %v1703, 40
        %v1744 = vpop.permute.xlu0 %1743
        %1745 = vrot.lane.b32.xlu0 %v1707, 40
        %v1746 = vpop.permute.xlu0 %1745
        %1747 = vrot.lane.b32.xlu0 %v1710, 40
        %v1748 = vpop.permute.xlu0 %1747
        %1749 = vrot.lane.b32.xlu0 %v1714, 40
        %v1750 = vpop.permute.xlu0 %1749
        %1751 = vrot.lane.b32.xlu0 %v1717, 40
        %v1752 = vpop.permute.xlu0 %1751
        %1753 = vrot.lane.b32.xlu0 %v1721, 40
        %v1754 = vpop.permute.xlu0 %1753
        %1755 = vrot.lane.b32.xlu0 %v1724, 40
        %v1756 = vpop.permute.xlu0 %1755
        %vm1773 = vcmask 388416
        %1774 = vst.msk [vmem:[#allocation3] sm:$0xf] %vm1773, %v1726
        %1775 = vst.msk [vmem:[#allocation3 + $0x4] sm:$0xf] %vm1773, %v1728
        %1776 = vst.msk [vmem:[#allocation3 + $0x8] sm:$0xf] %vm1773, %v1730
        %1777 = vst.msk [vmem:[#allocation3 + $0xc] sm:$0xf] %vm1773, %v1732
        %1778 = vst.msk [vmem:[#allocation3 + $0x10] sm:$0xf] %vm1773, %v1734
        %1779 = vst.msk [vmem:[#allocation3 + $0x14] sm:$0xf] %vm1773, %v1736
        %1780 = vst.msk [vmem:[#allocation3 + $0x18] sm:$0xf] %vm1773, %v1738
        %1781 = vst.msk [vmem:[#allocation3 + $0x1c] sm:$0xf] %vm1773, %v1740
        %1782 = vst.msk [vmem:[#allocation3 + $0x20] sm:$0xf] %vm1773, %v1742
        %1783 = vst.msk [vmem:[#allocation3 + $0x24] sm:$0xf] %vm1773, %v1744
        %1784 = vst.msk [vmem:[#allocation3 + $0x28] sm:$0xf] %vm1773, %v1746
        %1785 = vst.msk [vmem:[#allocation3 + $0x2c] sm:$0xf] %vm1773, %v1748
        %1786 = vst.msk [vmem:[#allocation3 + $0x30] sm:$0xf] %vm1773, %v1750
        %1787 = vst.msk [vmem:[#allocation3 + $0x34] sm:$0xf] %vm1773, %v1752
        %1788 = vst.msk [vmem:[#allocation3 + $0x38] sm:$0xf] %vm1773, %v1754
        %1789 = vst.msk [vmem:[#allocation3 + $0x3c] sm:$0xf] %vm1773, %v1756
        %s1790 = scalar_lea.vmem [#allocation2], 24
        %v1791 = vld [vmem:[%s1790] sm:$0xf]
        %v1792 = vld [vmem:[%s1790 + $0x4] sm:$0xf]
        %v1793 = vld [vmem:[%s1790 + $0xc] sm:$0xf]
        %v1794 = vld [vmem:[%s1790 + $0x10] sm:$0xf]
        %v1795 = vld [vmem:[%s1790 + $0x18] sm:$0xf]
        %v1796 = vld [vmem:[%s1790 + $0x1c] sm:$0xf]
        %v1797 = vld [vmem:[%s1790 + $0x24] sm:$0xf]
        %v1798 = vld [vmem:[%s1790 + $0x28] sm:$0xf]
        %v1799 = vld [vmem:[%s1790 + $0x30] sm:$0xf]
        %v1800 = vld [vmem:[%s1790 + $0x34] sm:$0xf]
        %v1801 = vld [vmem:[%s1790 + $0x3c] sm:$0xf]
        %v1802 = vld [vmem:[%s1790 + $0x40] sm:$0xf]
        %v1803 = vld [vmem:[%s1790 + $0x48] sm:$0xf]
        %v1804 = vld [vmem:[%s1790 + $0x4c] sm:$0xf]
        %v1805 = vld [vmem:[%s1790 + $0x54] sm:$0xf]
        %v1806 = vld [vmem:[%s1790 + $0x58] sm:$0xf]
        %1823 = vrot.lane.b32.xlu0 %v1791, 48
        %v1824 = vpop.permute.xlu0 %1823
        %1825 = vrot.lane.b32.xlu0 %v1792, 48
        %v1826 = vpop.permute.xlu0 %1825
        %1827 = vrot.lane.b32.xlu0 %v1793, 48
        %v1828 = vpop.permute.xlu0 %1827
        %1829 = vrot.lane.b32.xlu0 %v1794, 48
        %v1830 = vpop.permute.xlu0 %1829
        %1831 = vrot.lane.b32.xlu0 %v1795, 48
        %v1832 = vpop.permute.xlu0 %1831
        %1833 = vrot.lane.b32.xlu0 %v1796, 48
        %v1834 = vpop.permute.xlu0 %1833
        %1835 = vrot.lane.b32.xlu0 %v1797, 48
        %v1836 = vpop.permute.xlu0 %1835
        %1837 = vrot.lane.b32.xlu0 %v1798, 48
        %v1838 = vpop.permute.xlu0 %1837
        %1839 = vrot.lane.b32.xlu0 %v1799, 48
        %v1840 = vpop.permute.xlu0 %1839
        %1841 = vrot.lane.b32.xlu0 %v1800, 48
        %v1842 = vpop.permute.xlu0 %1841
        %1843 = vrot.lane.b32.xlu0 %v1801, 48
        %v1844 = vpop.permute.xlu0 %1843
        %1845 = vrot.lane.b32.xlu0 %v1802, 48
        %v1846 = vpop.permute.xlu0 %1845
        %1847 = vrot.lane.b32.xlu0 %v1803, 48
        %v1848 = vpop.permute.xlu0 %1847
        %1849 = vrot.lane.b32.xlu0 %v1804, 48
        %v1850 = vpop.permute.xlu0 %1849
        %1851 = vrot.lane.b32.xlu0 %v1805, 48
        %v1852 = vpop.permute.xlu0 %1851
        %1853 = vrot.lane.b32.xlu0 %v1806, 48
        %v1854 = vpop.permute.xlu0 %1853
        %vm1871 = vcmask 454016
        %1872 = vst.msk [vmem:[#allocation3] sm:$0xf] %vm1871, %v1824
        %1873 = vst.msk [vmem:[#allocation3 + $0x4] sm:$0xf] %vm1871, %v1826
        %1874 = vst.msk [vmem:[#allocation3 + $0x8] sm:$0xf] %vm1871, %v1828
        %1875 = vst.msk [vmem:[#allocation3 + $0xc] sm:$0xf] %vm1871, %v1830
        %1876 = vst.msk [vmem:[#allocation3 + $0x10] sm:$0xf] %vm1871, %v1832
        %1877 = vst.msk [vmem:[#allocation3 + $0x14] sm:$0xf] %vm1871, %v1834
        %1878 = vst.msk [vmem:[#allocation3 + $0x18] sm:$0xf] %vm1871, %v1836
        %1879 = vst.msk [vmem:[#allocation3 + $0x1c] sm:$0xf] %vm1871, %v1838
        %1880 = vst.msk [vmem:[#allocation3 + $0x20] sm:$0xf] %vm1871, %v1840
        %1881 = vst.msk [vmem:[#allocation3 + $0x24] sm:$0xf] %vm1871, %v1842
        %1882 = vst.msk [vmem:[#allocation3 + $0x28] sm:$0xf] %vm1871, %v1844
        %1883 = vst.msk [vmem:[#allocation3 + $0x2c] sm:$0xf] %vm1871, %v1846
        %1884 = vst.msk [vmem:[#allocation3 + $0x30] sm:$0xf] %vm1871, %v1848
        %1885 = vst.msk [vmem:[#allocation3 + $0x34] sm:$0xf] %vm1871, %v1850
        %1886 = vst.msk [vmem:[#allocation3 + $0x38] sm:$0xf] %vm1871, %v1852
        %1887 = vst.msk [vmem:[#allocation3 + $0x3c] sm:$0xf] %vm1871, %v1854
        %v1888 = vld [vmem:[%s1790] sm:$0xf]
        %v1889 = vld [vmem:[%s1790 + $0x4] sm:$0xf]
        %v1890 = vld [vmem:[%s1790 + $0x8] sm:$0x1]
        %v1891 = vld [vmem:[%s1790 + $0xc] sm:$0xf]
        %v1892 = vld [vmem:[%s1790 + $0x10] sm:$0xf]
        %v1893 = vld [vmem:[%s1790 + $0x14] sm:$0x1]
        %v1894 = vld [vmem:[%s1790 + $0x18] sm:$0xf]
        %v1895 = vld [vmem:[%s1790 + $0x1c] sm:$0xf]
        %v1896 = vld [vmem:[%s1790 + $0x20] sm:$0x1]
        %v1897 = vld [vmem:[%s1790 + $0x24] sm:$0xf]
        %v1898 = vld [vmem:[%s1790 + $0x28] sm:$0xf]
        %v1899 = vld [vmem:[%s1790 + $0x2c] sm:$0x1]
        %v1900 = vld [vmem:[%s1790 + $0x30] sm:$0xf]
        %v1901 = vld [vmem:[%s1790 + $0x34] sm:$0xf]
        %v1902 = vld [vmem:[%s1790 + $0x38] sm:$0x1]
        %v1903 = vld [vmem:[%s1790 + $0x3c] sm:$0xf]
        %v1904 = vld [vmem:[%s1790 + $0x40] sm:$0xf]
        %v1905 = vld [vmem:[%s1790 + $0x44] sm:$0x1]
        %v1906 = vld [vmem:[%s1790 + $0x48] sm:$0xf]
        %v1907 = vld [vmem:[%s1790 + $0x4c] sm:$0xf]
        %v1908 = vld [vmem:[%s1790 + $0x50] sm:$0x1]
        %v1909 = vld [vmem:[%s1790 + $0x54] sm:$0xf]
        %v1910 = vld [vmem:[%s1790 + $0x58] sm:$0xf]
        %v1911 = vld [vmem:[%s1790 + $0x5c] sm:$0x1]
        %v1913 = vshrl.u32 %v1888, 16
        %v1915 = vrot.slane %v1913, 4
        %v1916 = vshll.u32 %v1888, 16
        %v1918 = vrot.slane %v1916, 5
        %v1919 = vor.u32 %v1915, %v1918
        %v1920 = vrot.slane %v1919, 4
        %v1922 = vshll.u32 %v1889, 16
        %v1924 = vrot.slane %v1922, 5
        %v1925 = vsel %vm813, %v1920, %v1924
        %v1926 = vshrl.u32 %v1889, 16
        %v1928 = vrot.slane %v1926, 4
        %v1929 = vor.u32 %v1928, %v1924
        %v1930 = vrot.slane %v1929, 4
        %v1932 = vshll.u32 %v1890, 16
        %v1934 = vrot.slane %v1932, 5
        %v1935 = vsel %vm813, %v1930, %v1934
        %v1937 = vshrl.u32 %v1891, 16
        %v1939 = vrot.slane %v1937, 4
        %v1940 = vshll.u32 %v1891, 16
        %v1942 = vrot.slane %v1940, 5
        %v1943 = vor.u32 %v1939, %v1942
        %v1944 = vrot.slane %v1943, 4
        %v1946 = vshll.u32 %v1892, 16
        %v1948 = vrot.slane %v1946, 5
        %v1949 = vsel %vm813, %v1944, %v1948
        %v1950 = vshrl.u32 %v1892, 16
        %v1952 = vrot.slane %v1950, 4
        %v1953 = vor.u32 %v1952, %v1948
        %v1954 = vrot.slane %v1953, 4
        %v1956 = vshll.u32 %v1893, 16
        %v1958 = vrot.slane %v1956, 5
        %v1959 = vsel %vm813, %v1954, %v1958
        %v1961 = vshrl.u32 %v1894, 16
        %v1963 = vrot.slane %v1961, 4
        %v1964 = vshll.u32 %v1894, 16
        %v1966 = vrot.slane %v1964, 5
        %v1967 = vor.u32 %v1963, %v1966
        %v1968 = vrot.slane %v1967, 4
        %v1970 = vshll.u32 %v1895, 16
        %v1972 = vrot.slane %v1970, 5
        %v1973 = vsel %vm813, %v1968, %v1972
        %v1974 = vshrl.u32 %v1895, 16
        %v1976 = vrot.slane %v1974, 4
        %v1977 = vor.u32 %v1976, %v1972
        %v1978 = vrot.slane %v1977, 4
        %v1980 = vshll.u32 %v1896, 16
        %v1982 = vrot.slane %v1980, 5
        %v1983 = vsel %vm813, %v1978, %v1982
        %v1985 = vshrl.u32 %v1897, 16
        %v1987 = vrot.slane %v1985, 4
        %v1988 = vshll.u32 %v1897, 16
        %v1990 = vrot.slane %v1988, 5
        %v1991 = vor.u32 %v1987, %v1990
        %v1992 = vrot.slane %v1991, 4
        %v1994 = vshll.u32 %v1898, 16
        %v1996 = vrot.slane %v1994, 5
        %v1997 = vsel %vm813, %v1992, %v1996
        %v1998 = vshrl.u32 %v1898, 16
        %v2000 = vrot.slane %v1998, 4
        %v2001 = vor.u32 %v2000, %v1996
        %v2002 = vrot.slane %v2001, 4
        %v2004 = vshll.u32 %v1899, 16
        %v2006 = vrot.slane %v2004, 5
        %v2007 = vsel %vm813, %v2002, %v2006
        %v2009 = vshrl.u32 %v1900, 16
        %v2011 = vrot.slane %v2009, 4
        %v2012 = vshll.u32 %v1900, 16
        %v2014 = vrot.slane %v2012, 5
        %v2015 = vor.u32 %v2011, %v2014
        %v2016 = vrot.slane %v2015, 4
        %v2018 = vshll.u32 %v1901, 16
        %v2020 = vrot.slane %v2018, 5
        %v2021 = vsel %vm813, %v2016, %v2020
        %v2022 = vshrl.u32 %v1901, 16
        %v2024 = vrot.slane %v2022, 4
        %v2025 = vor.u32 %v2024, %v2020
        %v2026 = vrot.slane %v2025, 4
        %v2028 = vshll.u32 %v1902, 16
        %v2030 = vrot.slane %v2028, 5
        %v2031 = vsel %vm813, %v2026, %v2030
        %v2033 = vshrl.u32 %v1903, 16
        %v2035 = vrot.slane %v2033, 4
        %v2036 = vshll.u32 %v1903, 16
        %v2038 = vrot.slane %v2036, 5
        %v2039 = vor.u32 %v2035, %v2038
        %v2040 = vrot.slane %v2039, 4
        %v2042 = vshll.u32 %v1904, 16
        %v2044 = vrot.slane %v2042, 5
        %v2045 = vsel %vm813, %v2040, %v2044
        %v2046 = vshrl.u32 %v1904, 16
        %v2048 = vrot.slane %v2046, 4
        %v2049 = vor.u32 %v2048, %v2044
        %v2050 = vrot.slane %v2049, 4
        %v2052 = vshll.u32 %v1905, 16
        %v2054 = vrot.slane %v2052, 5
        %v2055 = vsel %vm813, %v2050, %v2054
        %v2057 = vshrl.u32 %v1906, 16
        %v2059 = vrot.slane %v2057, 4
        %v2060 = vshll.u32 %v1906, 16
        %v2062 = vrot.slane %v2060, 5
        %v2063 = vor.u32 %v2059, %v2062
        %v2064 = vrot.slane %v2063, 4
        %v2066 = vshll.u32 %v1907, 16
        %v2068 = vrot.slane %v2066, 5
        %v2069 = vsel %vm813, %v2064, %v2068
        %v2070 = vshrl.u32 %v1907, 16
        %v2072 = vrot.slane %v2070, 4
        %v2073 = vor.u32 %v2072, %v2068
        %v2074 = vrot.slane %v2073, 4
        %v2076 = vshll.u32 %v1908, 16
        %v2078 = vrot.slane %v2076, 5
        %v2079 = vsel %vm813, %v2074, %v2078
        %v2081 = vshrl.u32 %v1909, 16
        %v2083 = vrot.slane %v2081, 4
        %v2084 = vshll.u32 %v1909, 16
        %v2086 = vrot.slane %v2084, 5
        %v2087 = vor.u32 %v2083, %v2086
        %v2088 = vrot.slane %v2087, 4
        %v2090 = vshll.u32 %v1910, 16
        %v2092 = vrot.slane %v2090, 5
        %v2093 = vsel %vm813, %v2088, %v2092
        %v2094 = vshrl.u32 %v1910, 16
        %v2096 = vrot.slane %v2094, 4
        %v2097 = vor.u32 %v2096, %v2092
        %v2098 = vrot.slane %v2097, 4
        %v2100 = vshll.u32 %v1911, 16
        %v2102 = vrot.slane %v2100, 5
        %v2103 = vsel %vm813, %v2098, %v2102
        %2104 = vrot.lane.b32.xlu0 %v1925, 56
        %v2105 = vpop.permute.xlu0 %2104
        %2106 = vrot.lane.b32.xlu0 %v1935, 56
        %v2107 = vpop.permute.xlu0 %2106
        %2108 = vrot.lane.b32.xlu0 %v1949, 56
        %v2109 = vpop.permute.xlu0 %2108
        %2110 = vrot.lane.b32.xlu0 %v1959, 56
        %v2111 = vpop.permute.xlu0 %2110
        %2112 = vrot.lane.b32.xlu0 %v1973, 56
        %v2113 = vpop.permute.xlu0 %2112
        %2114 = vrot.lane.b32.xlu0 %v1983, 56
        %v2115 = vpop.permute.xlu0 %2114
        %2116 = vrot.lane.b32.xlu0 %v1997, 56
        %v2117 = vpop.permute.xlu0 %2116
        %2118 = vrot.lane.b32.xlu0 %v2007, 56
        %v2119 = vpop.permute.xlu0 %2118
        %2120 = vrot.lane.b32.xlu0 %v2021, 56
        %v2121 = vpop.permute.xlu0 %2120
        %2122 = vrot.lane.b32.xlu0 %v2031, 56
        %v2123 = vpop.permute.xlu0 %2122
        %2124 = vrot.lane.b32.xlu0 %v2045, 56
        %v2125 = vpop.permute.xlu0 %2124
        %2126 = vrot.lane.b32.xlu0 %v2055, 56
        %v2127 = vpop.permute.xlu0 %2126
        %2128 = vrot.lane.b32.xlu0 %v2069, 56
        %v2129 = vpop.permute.xlu0 %2128
        %2130 = vrot.lane.b32.xlu0 %v2079, 56
        %v2131 = vpop.permute.xlu0 %2130
        %2132 = vrot.lane.b32.xlu0 %v2093, 56
        %v2133 = vpop.permute.xlu0 %2132
        %2134 = vrot.lane.b32.xlu0 %v2103, 56
        %v2135 = vpop.permute.xlu0 %2134
        %vm2152 = vcmask 519616
        %2153 = vst.msk [vmem:[#allocation3] sm:$0xf] %vm2152, %v2105
        %2154 = vst.msk [vmem:[#allocation3 + $0x4] sm:$0xf] %vm2152, %v2107
        %2155 = vst.msk [vmem:[#allocation3 + $0x8] sm:$0xf] %vm2152, %v2109
        %2156 = vst.msk [vmem:[#allocation3 + $0xc] sm:$0xf] %vm2152, %v2111
        %2157 = vst.msk [vmem:[#allocation3 + $0x10] sm:$0xf] %vm2152, %v2113
        %2158 = vst.msk [vmem:[#allocation3 + $0x14] sm:$0xf] %vm2152, %v2115
        %2159 = vst.msk [vmem:[#allocation3 + $0x18] sm:$0xf] %vm2152, %v2117
        %2160 = vst.msk [vmem:[#allocation3 + $0x1c] sm:$0xf] %vm2152, %v2119
        %2161 = vst.msk [vmem:[#allocation3 + $0x20] sm:$0xf] %vm2152, %v2121
        %2162 = vst.msk [vmem:[#allocation3 + $0x24] sm:$0xf] %vm2152, %v2123
        %2163 = vst.msk [vmem:[#allocation3 + $0x28] sm:$0xf] %vm2152, %v2125
        %2164 = vst.msk [vmem:[#allocation3 + $0x2c] sm:$0xf] %vm2152, %v2127
        %2165 = vst.msk [vmem:[#allocation3 + $0x30] sm:$0xf] %vm2152, %v2129
        %2166 = vst.msk [vmem:[#allocation3 + $0x34] sm:$0xf] %vm2152, %v2131
        %2167 = vst.msk [vmem:[#allocation3 + $0x38] sm:$0xf] %vm2152, %v2133
        %2168 = vst.msk [vmem:[#allocation3 + $0x3c] sm:$0xf] %vm2152, %v2135
        %v2169 = vld [vmem:[%s1790] sm:$0xe]
        %v2170 = vld [vmem:[%s1790 + $0x4] sm:$0xf]
        %v2171 = vld [vmem:[%s1790 + $0x8] sm:$0x1]
        %v2172 = vld [vmem:[%s1790 + $0xc] sm:$0xe]
        %v2173 = vld [vmem:[%s1790 + $0x10] sm:$0xf]
        %v2174 = vld [vmem:[%s1790 + $0x14] sm:$0x1]
        %v2175 = vld [vmem:[%s1790 + $0x18] sm:$0xe]
        %v2176 = vld [vmem:[%s1790 + $0x1c] sm:$0xf]
        %v2177 = vld [vmem:[%s1790 + $0x20] sm:$0x1]
        %v2178 = vld [vmem:[%s1790 + $0x24] sm:$0xe]
        %v2179 = vld [vmem:[%s1790 + $0x28] sm:$0xf]
        %v2180 = vld [vmem:[%s1790 + $0x2c] sm:$0x1]
        %v2181 = vld [vmem:[%s1790 + $0x30] sm:$0xe]
        %v2182 = vld [vmem:[%s1790 + $0x34] sm:$0xf]
        %v2183 = vld [vmem:[%s1790 + $0x38] sm:$0x1]
        %v2184 = vld [vmem:[%s1790 + $0x3c] sm:$0xe]
        %v2185 = vld [vmem:[%s1790 + $0x40] sm:$0xf]
        %v2186 = vld [vmem:[%s1790 + $0x44] sm:$0x1]
        %v2187 = vld [vmem:[%s1790 + $0x48] sm:$0xe]
        %v2188 = vld [vmem:[%s1790 + $0x4c] sm:$0xf]
        %v2189 = vld [vmem:[%s1790 + $0x50] sm:$0x1]
        %v2190 = vld [vmem:[%s1790 + $0x54] sm:$0xe]
        %v2191 = vld [vmem:[%s1790 + $0x58] sm:$0xf]
        %v2192 = vld [vmem:[%s1790 + $0x5c] sm:$0x1]
        %v2217 = vrot.slane %v2169, 5
        %v2218 = vrot.slane %v2217, 4
        %v2219 = vrot.slane %v2170, 5
        %v2220 = vsel %vm1121, %v2218, %v2219
        %v2221 = vrot.slane %v2219, 4
        %v2222 = vrot.slane %v2171, 5
        %v2223 = vsel %vm1121, %v2221, %v2222
        %v2224 = vrot.slane %v2172, 5
        %v2225 = vrot.slane %v2224, 4
        %v2226 = vrot.slane %v2173, 5
        %v2227 = vsel %vm1121, %v2225, %v2226
        %v2228 = vrot.slane %v2226, 4
        %v2229 = vrot.slane %v2174, 5
        %v2230 = vsel %vm1121, %v2228, %v2229
        %v2231 = vrot.slane %v2175, 5
        %v2232 = vrot.slane %v2231, 4
        %v2233 = vrot.slane %v2176, 5
        %v2234 = vsel %vm1121, %v2232, %v2233
        %v2235 = vrot.slane %v2233, 4
        %v2236 = vrot.slane %v2177, 5
        %v2237 = vsel %vm1121, %v2235, %v2236
        %v2238 = vrot.slane %v2178, 5
        %v2239 = vrot.slane %v2238, 4
        %v2240 = vrot.slane %v2179, 5
        %v2241 = vsel %vm1121, %v2239, %v2240
        %v2242 = vrot.slane %v2240, 4
        %v2243 = vrot.slane %v2180, 5
        %v2244 = vsel %vm1121, %v2242, %v2243
        %v2245 = vrot.slane %v2181, 5
        %v2246 = vrot.slane %v2245, 4
        %v2247 = vrot.slane %v2182, 5
        %v2248 = vsel %vm1121, %v2246, %v2247
        %v2249 = vrot.slane %v2247, 4
        %v2250 = vrot.slane %v2183, 5
        %v2251 = vsel %vm1121, %v2249, %v2250
        %v2252 = vrot.slane %v2184, 5
        %v2253 = vrot.slane %v2252, 4
        %v2254 = vrot.slane %v2185, 5
        %v2255 = vsel %vm1121, %v2253, %v2254
        %v2256 = vrot.slane %v2254, 4
        %v2257 = vrot.slane %v2186, 5
        %v2258 = vsel %vm1121, %v2256, %v2257
        %v2259 = vrot.slane %v2187, 5
        %v2260 = vrot.slane %v2259, 4
        %v2261 = vrot.slane %v2188, 5
        %v2262 = vsel %vm1121, %v2260, %v2261
        %v2263 = vrot.slane %v2261, 4
        %v2264 = vrot.slane %v2189, 5
        %v2265 = vsel %vm1121, %v2263, %v2264
        %v2266 = vrot.slane %v2190, 5
        %v2267 = vrot.slane %v2266, 4
        %v2268 = vrot.slane %v2191, 5
        %v2269 = vsel %vm1121, %v2267, %v2268
        %v2270 = vrot.slane %v2268, 4
        %v2271 = vrot.slane %v2192, 5
        %v2272 = vsel %vm1121, %v2270, %v2271
        %2273 = vrot.lane.b32.xlu0 %v2220, 64
        %v2274 = vpop.permute.xlu0 %2273
        %2275 = vrot.lane.b32.xlu0 %v2223, 64
        %v2276 = vpop.permute.xlu0 %2275
        %2277 = vrot.lane.b32.xlu0 %v2227, 64
        %v2278 = vpop.permute.xlu0 %2277
        %2279 = vrot.lane.b32.xlu0 %v2230, 64
        %v2280 = vpop.permute.xlu0 %2279
        %2281 = vrot.lane.b32.xlu0 %v2234, 64
        %v2282 = vpop.permute.xlu0 %2281
        %2283 = vrot.lane.b32.xlu0 %v2237, 64
        %v2284 = vpop.permute.xlu0 %2283
        %2285 = vrot.lane.b32.xlu0 %v2241, 64
        %v2286 = vpop.permute.xlu0 %2285
        %2287 = vrot.lane.b32.xlu0 %v2244, 64
        %v2288 = vpop.permute.xlu0 %2287
        %2289 = vrot.lane.b32.xlu0 %v2248, 64
        %v2290 = vpop.permute.xlu0 %2289
        %2291 = vrot.lane.b32.xlu0 %v2251, 64
        %v2292 = vpop.permute.xlu0 %2291
        %2293 = vrot.lane.b32.xlu0 %v2255, 64
        %v2294 = vpop.permute.xlu0 %2293
        %2295 = vrot.lane.b32.xlu0 %v2258, 64
        %v2296 = vpop.permute.xlu0 %2295
        %2297 = vrot.lane.b32.xlu0 %v2262, 64
        %v2298 = vpop.permute.xlu0 %2297
        %2299 = vrot.lane.b32.xlu0 %v2265, 64
        %v2300 = vpop.permute.xlu0 %2299
        %2301 = vrot.lane.b32.xlu0 %v2269, 64
        %v2302 = vpop.permute.xlu0 %2301
        %2303 = vrot.lane.b32.xlu0 %v2272, 64
        %v2304 = vpop.permute.xlu0 %2303
        %vm2321 = vcmask 585216
        %2322 = vst.msk [vmem:[#allocation3] sm:$0xf] %vm2321, %v2274
        %2323 = vst.msk [vmem:[#allocation3 + $0x4] sm:$0xf] %vm2321, %v2276
        %2324 = vst.msk [vmem:[#allocation3 + $0x8] sm:$0xf] %vm2321, %v2278
        %2325 = vst.msk [vmem:[#allocation3 + $0xc] sm:$0xf] %vm2321, %v2280
        %2326 = vst.msk [vmem:[#allocation3 + $0x10] sm:$0xf] %vm2321, %v2282
        %2327 = vst.msk [vmem:[#allocation3 + $0x14] sm:$0xf] %vm2321, %v2284
        %2328 = vst.msk [vmem:[#allocation3 + $0x18] sm:$0xf] %vm2321, %v2286
        %2329 = vst.msk [vmem:[#allocation3 + $0x1c] sm:$0xf] %vm2321, %v2288
        %2330 = vst.msk [vmem:[#allocation3 + $0x20] sm:$0xf] %vm2321, %v2290
        %2331 = vst.msk [vmem:[#allocation3 + $0x24] sm:$0xf] %vm2321, %v2292
        %2332 = vst.msk [vmem:[#allocation3 + $0x28] sm:$0xf] %vm2321, %v2294
        %2333 = vst.msk [vmem:[#allocation3 + $0x2c] sm:$0xf] %vm2321, %v2296
        %2334 = vst.msk [vmem:[#allocation3 + $0x30] sm:$0xf] %vm2321, %v2298
        %2335 = vst.msk [vmem:[#allocation3 + $0x34] sm:$0xf] %vm2321, %v2300
        %2336 = vst.msk [vmem:[#allocation3 + $0x38] sm:$0xf] %vm2321, %v2302
        %2337 = vst.msk [vmem:[#allocation3 + $0x3c] sm:$0xf] %vm2321, %v2304
        %v2338 = vld [vmem:[#allocation3] sm:$0xf]
        %v2339 = vld [vmem:[#allocation3 + $0x4] sm:$0xf]
        %v2340 = vld [vmem:[#allocation3 + $0x8] sm:$0xf]
        %v2341 = vld [vmem:[#allocation3 + $0xc] sm:$0xf]
        %v2342 = vld [vmem:[#allocation3 + $0x10] sm:$0xf]
        %v2343 = vld [vmem:[#allocation3 + $0x14] sm:$0xf]
        %v2344 = vld [vmem:[#allocation3 + $0x18] sm:$0xf]
        %v2345 = vld [vmem:[#allocation3 + $0x1c] sm:$0xf]
        %v2346 = vld [vmem:[#allocation3 + $0x20] sm:$0xf]
        %v2347 = vld [vmem:[#allocation3 + $0x24] sm:$0xf]
        %v2348 = vld [vmem:[#allocation3 + $0x28] sm:$0xf]
        %v2349 = vld [vmem:[#allocation3 + $0x2c] sm:$0xf]
        %v2350 = vld [vmem:[#allocation3 + $0x30] sm:$0xf]
        %v2351 = vld [vmem:[#allocation3 + $0x34] sm:$0xf]
        %v2352 = vld [vmem:[#allocation3 + $0x38] sm:$0xf]
        %v2353 = vld [vmem:[#allocation3 + $0x3c] sm:$0xf]
        %v2354 = vld [vmem:[%s3] sm:$0xf]
        %v2355 = vld [vmem:[%s3 + $0x4] sm:$0xf]
        %v2356 = vld [vmem:[%s4] sm:$0xff]
        %v2357 = vld [vmem:[%s4 + $0x8] sm:$0xff]
        %2359 = vset.pattern.permute.xlu0 0
        %2360 = vperm.xlu0 %2359, %v2356
        %v2361 = vpop.permute.xlu0 %2360
        %2364 = vset.pattern.permute.xlu0 0
        %2365 = vperm.xlu0 %2364, %v2357
        %v2366 = vpop.permute.xlu0 %2365
        %v2370 = vunpack.c.l.b16 %v2354
        %v2371 = vunpack.c.l.b16 %v2355
        %v2372 = vpack.c.b16 %v2371, %v2370
        %v2389 = vunpack.c.l.b16 %v2338
        %v2390 = vunpack.c.l.b16 %v2339
        %v2391 = vunpack.c.l.b16 %v2340
        %v2392 = vunpack.c.l.b16 %v2341
        %v2393 = vunpack.c.l.b16 %v2342
        %v2394 = vunpack.c.l.b16 %v2343
        %v2395 = vunpack.c.l.b16 %v2344
        %v2396 = vunpack.c.l.b16 %v2345
        %v2397 = vunpack.c.l.b16 %v2346
        %v2398 = vunpack.c.l.b16 %v2347
        %v2399 = vunpack.c.l.b16 %v2348
        %v2400 = vunpack.c.l.b16 %v2349
        %v2401 = vunpack.c.l.b16 %v2350
        %v2402 = vunpack.c.l.b16 %v2351
        %v2403 = vunpack.c.l.b16 %v2352
        %v2404 = vunpack.c.l.b16 %v2353
        %v2405 = vpack.c.b16 %v2390, %v2389
        %v2406 = vpack.c.b16 %v2392, %v2391
        %v2407 = vpack.c.b16 %v2394, %v2393
        %v2408 = vpack.c.b16 %v2396, %v2395
        %v2409 = vpack.c.b16 %v2398, %v2397
        %v2410 = vpack.c.b16 %v2400, %v2399
        %v2411 = vpack.c.b16 %v2402, %v2401
        %v2412 = vpack.c.b16 %v2404, %v2403
        %vm2413 = vcmask 588800
        %v2415 = vsel %vm2413, %v2372, 0
        %v2418 = vsel %vm2413, %v2405, 0
        %v2421 = vsel %vm2413, %v2406, 0
        %v2424 = vsel %vm2413, %v2407, 0
        %v2427 = vsel %vm2413, %v2408, 0
        %v2430 = vsel %vm2413, %v2409, 0
        %v2433 = vsel %vm2413, %v2410, 0
        %v2436 = vsel %vm2413, %v2411, 0
        %v2439 = vsel %vm2413, %v2412, 0
        %2441 = vmatprep.subr.bf16.mxu0 0
        %2442 = vmatpush1.bf16.xpose.msra.mxu0 %v2439
        %2443 = vmatprep.subr.bf16.mxu0 0
        %2444 = vmatpush1.bf16.xpose.msra.mxu0 %v2436
        %2445 = vmatprep.subr.bf16.mxu0 0
        %2446 = vmatpush1.bf16.xpose.msra.mxu0 %v2433
        %2447 = vmatprep.subr.bf16.mxu0 0
        %2448 = vmatpush1.bf16.xpose.msra.mxu0 %v2430
        %2449 = vmatprep.subr.bf16.mxu0 0
        %2450 = vmatpush1.bf16.xpose.msra.mxu0 %v2427
        %2451 = vmatprep.subr.bf16.mxu0 0
        %2452 = vmatpush1.bf16.xpose.msra.mxu0 %v2424
        %2453 = vmatprep.subr.bf16.mxu0 0
        %2454 = vmatpush1.bf16.xpose.msra.mxu0 %v2421
        %2455 = vmatprep.subr.bf16.mxu0 0
        %2456 = vmatpush1.bf16.xpose.msra.mxu0 %v2418
        %2457 = vmatprep.subr.bf16.mxu0 0
        %2458 = vmatpush2.bf16.xpose.msra.mxu0 0
        %2459 = vmatprep.subr.bf16.mxu0 0
        %2460 = vmatpush2.bf16.xpose.msra.mxu0 0
        %2461 = vmatprep.subr.bf16.mxu0 0
        %2462 = vmatpush2.bf16.xpose.msra.mxu0 0
        %2463 = vmatprep.subr.bf16.mxu0 0
        %2464 = vmatpush2.bf16.xpose.msra.mxu0 0
        %2465 = vmatprep.subr.bf16.mxu0 0
        %2466 = vmatpush2.bf16.xpose.msra.mxu0 0
        %2467 = vmatprep.subr.bf16.mxu0 0
        %2468 = vmatpush2.bf16.xpose.msra.mxu0 0
        %2469 = vmatprep.subr.bf16.mxu0 0
        %2470 = vmatpush2.bf16.xpose.msra.mxu0 0
        %2471 = vmatprep.subr.bf16.mxu0 0
        %2472 = vmatpush2.bf16.xpose.msra.mxu0 0
        %2473 = vmatprep.mubr.bf16.mxu0 0
        %2474 = vmatmul.mubr.bf16.gmra.mxu0 %v2415
        %v2475 = vpop.f32.mrf.mxu0
        %v2476 = vadd.f32 %v2361, %v2475
        %v2477 = vpop.f32.mrf.mxu0
        %v2478 = vpop.f32.mrf.mxu0
        %v2479 = vadd.f32 %v2366, %v2478
        %v2480 = vpop.f32.mrf.mxu0
        %2481 = vdwg.mxu0
        %v2482 = vxor.u32 %v2476, 2147483648
        %v2483 = vmul.f32 %v2482, 1.442695
        %v2484 = vpow.pop %v2483
        %v2485 = vadd.f32 %v2484, 1.0
        %v2486 = vrcp.pop %v2485
        %v2487 = vmul.f32 1.0, %v2486
        %v2488 = vtanh.pop %v2479
        %v2489 = vmul.f32 %v2487, %v2488
        %v2490 = vpack.c.bf16 %v2489, %v2489
        %2491 = vst [vmem:[%s334] sm:$0xf] %v2490
        %s2492 = sand.u32 %s183, 1
        %s2493 = scalar_lea.sflag [#allocation5], %s2492
        %s2494 = sand.u32 %s183, 1
        %s2495 = smul.addr %s2494, 4
        %s2496 = scalar_lea.vmem [#allocation4], %s2495
        // Predicated region
        $region41: #{tpu_custom_call.1} parent=39 // pred_check
          %p2497 = pneg %p193
        $region42: #{tpu_custom_call.1} parent=39 // pred_check_branch
          %2499 = sbr.rel (%p2497) target = $region44
        $region43: #{tpu_custom_call.1} parent=39 // pred_region
          %s2501 = ssub.s32 64, 64
          %2502 = vsyncadd %s2493, %s2501
          %s2503 = smul.addr %s23, 2
          %s2504 = sadd.s32 %s24, %s2503
          %s2505 = smul.addr %s2504, 64
          %s2506 = scalar_lea.hbm %s5, %s2505
          %s2508 = sshll.u32 %s2496, 4
          %s2509 = int_to_ptr.vmem [resolvable:$true] %s2508
          %2511 = dma.vmem_to_hbm [thread:$0]  %s2509, 64, %s2506, %s2493
        $region44: #{tpu_custom_call.1} parent=39 // pred_fallthru
          _
      $region40: #{tpu_custom_call.1} parent=5 // pred_fallthru
        _
      %p2512 = scmp.le.s32.totalorder 2, %s14
      // Predicated region
      $region45: #{tpu_custom_call.1} parent=5 // pred_check
        %p2513 = pneg %p2512
      $region46: #{tpu_custom_call.1} parent=5 // pred_check_branch
        %2515 = sbr.rel (%p2513) target = $region48
      $region47: #{tpu_custom_call.1} parent=5 // pred_region
        %s2516 = ssub.s32 %s14, 2
        // Predicated region
        $region49: #{tpu_custom_call.1} parent=47 // pred_check
          %p2517 = pneg %p199
        $region50: #{tpu_custom_call.1} parent=47 // pred_check_branch
          %2519 = sbr.rel (%p2517) target = $region52
        $region51: #{tpu_custom_call.1} parent=47 // pred_region
          %s2520 = sand.u32 %s184, 1
          %s2521 = scalar_lea.sflag [#allocation5], %s2520
          %s2522 = sand.u32 %s184, 1
          %s2523 = smul.addr %s2522, 4
          %s2524 = scalar_lea.vmem [#allocation4], %s2523
          %2525 = dma.done %s2521, 64
        $region52: #{tpu_custom_call.1} parent=47 // pred_fallthru
          _
      $region48: #{tpu_custom_call.1} parent=5 // pred_fallthru
        _
    $region6: #{tpu_custom_call.1} parent=1 // loop_footer
      %s18 = sadd.s32 1, %s14
    $region7: #{tpu_custom_call.1} parent=1 // loop_footer_branch
      %13 = sbr.rel target = $region3
    $region8: #{tpu_custom_call.1} parent=1 // loop_exit
      _
    %2526 = vsyncpa [#allocation5], 1
    %s2527 = scalar_lea.sflag [#allocation5], 1
    %2528 = vsyncpa %s2527, 1

</llo_original>
